<compile_context>
chip_gen: v7x
topology: tpu7x:2x2x1
jax: 0.10.0
libtpu: 0.0.40
codegen_flags: <defaults>
</compile_context>

<pallas_src>
import jax
import jax.numpy as jnp
from jax.experimental import pallas as pl
from jax.experimental.pallas import tpu as pltpu

LANE = 128      # lane width / MXU edge alignment
SUBLANE = 16    # bf16 sublane packing -> batch tiles are multiples of 16


def _round_up(x, m):
    return (x + m - 1) // m * m


def encoder_kernel(x_ref, w1_ref, b1_ref, w2_ref, b2_ref, mu_ref, ls_ref):
    # Two fused MXU matmuls with f32 accumulation; bias-add + ReLU in f32 (VPU).
    x = x_ref[...]
    h = jnp.dot(x, w1_ref[...], preferred_element_type=jnp.float32) + b1_ref[...]
    h = jnp.maximum(h, 0.0)                                   # ReLU (f32)
    y = jnp.dot(h.astype(w2_ref.dtype), w2_ref[...],
                preferred_element_type=jnp.float32) + b2_ref[...]
    y = y.astype(mu_ref.dtype)
    lat = mu_ref.shape[-1]                  # 128-aligned -> tile-boundary slice
    mu_ref[...] = y[:, :lat]
    ls_ref[...] = y[:, lat:]


def encoder_forward(x, w1, b1, w2, b2, *, batch_tile=None,
                    compute_dtype=jnp.bfloat16):
    """x: (B, in_dim); w1: (in_dim, hidden); b1: (1, hidden);
    w2: (hidden, 2*latent); b2: (1, 2*latent).
    Returns (mu, log_std), each (B, latent), float32."""
    B, in_dim = x.shape
    hidden = w1.shape[1]
    out_dim = w2.shape[1]
    assert out_dim % 2 == 0
    latent_dim = out_dim // 2

    # Lane-dense padded problem sizes.
    in_pad = _round_up(in_dim, LANE)
    hid_pad = _round_up(hidden, LANE)
    lat_pad = _round_up(latent_dim, LANE)
    out_pad = 2 * lat_pad

    # Batch tile: multiple of 16, defaulting to 256 rows so that large batches
    # get a multi-step (pipelined) grid; ragged B is padded and sliced back.
    if batch_tile is None:
        batch_tile = min(256, _round_up(B, SUBLANE))
    batch_tile = _round_up(batch_tile, SUBLANE)
    B_pad = _round_up(B, batch_tile)
    grid = (B_pad // batch_tile,)

    # Pad / cast operands (zero padding is inert for this network).
    xc = jnp.pad(x.astype(compute_dtype),
                 ((0, B_pad - B), (0, in_pad - in_dim)))
    w1c = jnp.pad(w1.astype(compute_dtype),
                  ((0, in_pad - in_dim), (0, hid_pad - hidden)))
    b1c = jnp.pad(b1.reshape(1, hidden).astype(jnp.float32),
                  ((0, 0), (0, hid_pad - hidden)))
    w2c = w2.astype(compute_dtype)
    b2c = b2.reshape(1, out_dim).astype(jnp.float32)
    # Split W2/b2 into mu- and log_std-halves, pad each half to lat_pad cols.
    w2_mu = jnp.pad(w2c[:, :latent_dim],
                    ((0, hid_pad - hidden), (0, lat_pad - latent_dim)))
    w2_ls = jnp.pad(w2c[:, latent_dim:],
                    ((0, hid_pad - hidden), (0, lat_pad - latent_dim)))
    w2p = jnp.concatenate([w2_mu, w2_ls], axis=1)             # (hid_pad, out_pad)
    b2_mu = jnp.pad(b2c[:, :latent_dim], ((0, 0), (0, lat_pad - latent_dim)))
    b2_ls = jnp.pad(b2c[:, latent_dim:], ((0, 0), (0, lat_pad - latent_dim)))
    b2p = jnp.concatenate([b2_mu, b2_ls], axis=1)             # (1, out_pad)

    # Cost / VMEM bookkeeping.
    cbytes = jnp.dtype(compute_dtype).itemsize
    flops = 2 * B_pad * (in_pad * hid_pad + hid_pad * out_pad)
    bytes_accessed = (B_pad * in_pad * cbytes
                      + (in_pad * hid_pad + hid_pad * out_pad) * cbytes
                      + (hid_pad + out_pad) * 4
                      + 2 * B_pad * lat_pad * 4)
    w_bytes = ((in_pad * hid_pad + hid_pad * out_pad) * cbytes
               + (hid_pad + out_pad) * 4)
    io_bytes = (2 * batch_tile * in_pad * cbytes          # double-buffered x
                + 2 * 2 * batch_tile * lat_pad * 4)       # double-buffered outs
    tmp_bytes = batch_tile * (hid_pad + out_pad) * 4      # f32 intermediates
    vmem_est = 2 * w_bytes + io_bytes + tmp_bytes
    vmem_limit = int(min(max(2 * vmem_est, 32 * 1024 * 1024), 64 * 1024 * 1024))

    out_shape = (jax.ShapeDtypeStruct((B_pad, lat_pad), jnp.float32),
                 jax.ShapeDtypeStruct((B_pad, lat_pad), jnp.float32))

    def _build(single_buffer_weights):
        def wspec(shape):
            # Grid-invariant weights/biases never need a second pipeline buffer.
            if single_buffer_weights and hasattr(pl, "Buffered"):
                return pl.BlockSpec(shape, lambda i: (0, 0),
                                    pipeline_mode=pl.Buffered(1))
            return pl.BlockSpec(shape, lambda i: (0, 0))

        return pl.pallas_call(
            encoder_kernel,
            out_shape=out_shape,
            grid_spec=pltpu.PrefetchScalarGridSpec(
                num_scalar_prefetch=0,
                grid=grid,
                in_specs=[
                    pl.BlockSpec((batch_tile, in_pad), lambda i: (i, 0)),   # x tile
                    wspec((in_pad, hid_pad)),                               # W1
                    wspec((1, hid_pad)),                                    # b1
                    wspec((hid_pad, out_pad)),                              # W2
                    wspec((1, out_pad)),                                    # b2
                ],
                out_specs=[
                    pl.BlockSpec((batch_tile, lat_pad), lambda i: (i, 0)),  # mu
                    pl.BlockSpec((batch_tile, lat_pad), lambda i: (i, 0)),  # log_std
                ],
            ),
            compiler_params=pltpu.CompilerParams(
                dimension_semantics=("parallel",),
                vmem_limit_bytes=vmem_limit),
            cost_estimate=pl.CostEstimate(flops=flops, transcendentals=0,
                                          bytes_accessed=bytes_accessed),
        )

    try:
        mu_p, ls_p = _build(True)(xc, w1c, b1c, w2p, b2p)
    except Exception:
        # Fallback: default double-buffered weight specs if this JAX / Mosaic
        # build rejects single-buffered pipeline_mode.
        mu_p, ls_p = _build(False)(xc, w1c, b1c, w2p, b2p)

    mu = mu_p[:B, :latent_dim]
    log_std = ls_p[:B, :latent_dim]
    return mu, log_std


def init_params(key, in_dim, latent_dim, hidden_dim=None, dtype=jnp.float32):
    """Deterministic init mirroring nn.Linear default (uniform +-1/sqrt(fan_in))."""
    if hidden_dim is None:
        hidden_dim = in_dim
    k1, k2, k3, k4 = jax.random.split(key, 4)
    lim1 = 1.0 / (in_dim ** 0.5)
    lim2 = 1.0 / (hidden_dim ** 0.5)
    w1 = jax.random.uniform(k1, (in_dim, hidden_dim), dtype, -lim1, lim1)
    b1 = jax.random.uniform(k2, (1, hidden_dim), dtype, -lim1, lim1)
    w2 = jax.random.uniform(k3, (hidden_dim, 2 * latent_dim), dtype, -lim2, lim2)
    b2 = jax.random.uniform(k4, (1, 2 * latent_dim), dtype, -lim2, lim2)
    return w1, b1, w2, b2


def _reference(x, w1, b1, w2, b2, compute_dtype):
    """Pure-JAX reference matching the kernel's compute-dtype policy."""
    cd = compute_dtype
    b1f = b1.reshape(1, -1).astype(jnp.float32)
    b2f = b2.reshape(1, -1).astype(jnp.float32)
    h = jnp.dot(x.astype(cd), w1.astype(cd),
                preferred_element_type=jnp.float32) + b1f
    h = jnp.maximum(h, 0.0)
    y = jnp.dot(h.astype(cd), w2.astype(cd),
                preferred_element_type=jnp.float32) + b2f
    ld = w2.shape[1] // 2
    return y[:, :ld], y[:, ld:]


if __name__ == "__main__":
    key = jax.random.PRNGKey(0)
    kx, kp, kx2, kp2 = jax.random.split(key, 4)

    # Config 1: lane-aligned dims, multi-step pipelined grid, bf16 compute.
    B, in_dim, latent_dim = 512, 128, 128
    hidden_dim = in_dim                       # module default: hidden_dim = in_dim
    x = jax.random.normal(kx, (B, in_dim), jnp.float32)
    w1, b1, w2, b2 = init_params(kp, in_dim, latent_dim, hidden_dim)

    mu, log_std = encoder_forward(x, w1, b1, w2, b2)     # bf16 compute, f32 accum
    jax.block_until_ready((mu, log_std))
    mu_ref, ls_ref = _reference(x, w1, b1, w2, b2, jnp.bfloat16)
    assert mu.shape == (B, latent_dim) and log_std.shape == (B, latent_dim)
    assert jnp.allclose(mu, mu_ref, atol=2e-2, rtol=2e-2)
    assert jnp.allclose(log_std, ls_ref, atol=2e-2, rtol=2e-2)

    # Config 2: small ragged / unaligned shapes exercise the padding path (f32).
    B2, in2, lat2, hid2 = 8, 32, 16, 48
    x2 = jax.random.normal(kx2, (B2, in2), jnp.float32)
    w1b, b1b, w2b, b2b = init_params(kp2, in2, lat2, hid2)
    mu2, ls2 = encoder_forward(x2, w1b, b1b, w2b, b2b, compute_dtype=jnp.float32)
    jax.block_until_ready((mu2, ls2))
    mu2_ref, ls2_ref = _reference(x2, w1b, b1b, w2b, b2b, jnp.float32)
    assert mu2.shape == (B2, lat2) and ls2.shape == (B2, lat2)
    assert jnp.allclose(mu2, mu2_ref, atol=1e-2, rtol=1e-2)
    assert jnp.allclose(ls2, ls2_ref, atol=1e-2, rtol=1e-2)

    print("KERNEL_OK")
</pallas_src>

<mosaic_0001>
module attributes {stable_mosaic.version = 11 : i64} {
  func.func @encoder_kernel(%arg0: i32, %arg1: memref<256x128xbf16, #tpu.memory_space<vmem>>, %arg2: memref<128x128xbf16, #tpu.memory_space<vmem>>, %arg3: memref<1x128xf32, #tpu.memory_space<vmem>>, %arg4: memref<128x256xbf16, #tpu.memory_space<vmem>>, %arg5: memref<1x256xf32, #tpu.memory_space<vmem>>, %arg6: memref<256x128xf32, #tpu.memory_space<vmem>>, %arg7: memref<256x128xf32, #tpu.memory_space<vmem>>) attributes {dimension_semantics = [#tpu.dimension_semantics<parallel>], iteration_bounds = array<i64: 2>, scalar_prefetch = 0 : i64, scratch_operands = 0 : i64, tpu.core_type = #tpu.core_type<tc>, window_params = [{transform_indices = @transform_0, window_bounds = array<i64: 256, 128>}, {pipeline_mode = #tpu.pipeline_mode<synchronous>, transform_indices = @transform_1, window_bounds = array<i64: 128, 128>}, {pipeline_mode = #tpu.pipeline_mode<synchronous>, transform_indices = @transform_2, window_bounds = array<i64: 1, 128>}, {pipeline_mode = #tpu.pipeline_mode<synchronous>, transform_indices = @transform_3, window_bounds = array<i64: 128, 256>}, {pipeline_mode = #tpu.pipeline_mode<synchronous>, transform_indices = @transform_4, window_bounds = array<i64: 1, 256>}, {transform_indices = @transform_5, window_bounds = array<i64: 256, 128>}, {transform_indices = @transform_6, window_bounds = array<i64: 256, 128>}]} {
    %c0 = arith.constant 0 : index
    %c0_0 = arith.constant 0 : index
    %0 = vector.load %arg1[%c0, %c0_0] : memref<256x128xbf16, #tpu.memory_space<vmem>>, vector<256x128xbf16>
    %c0_1 = arith.constant 0 : index
    %c0_2 = arith.constant 0 : index
    %1 = vector.load %arg2[%c0_1, %c0_2] : memref<128x128xbf16, #tpu.memory_space<vmem>>, vector<128x128xbf16>
    %cst = arith.constant dense<0.000000e+00> : vector<256x128xf32>
    %2 = tpu.matmul %0, %1, %cst {dimension_numbers = #tpu.dot_dimension_numbers<[1], [0], [0], [1], [0, 0, 1, 1], [], []>} : vector<256x128xbf16>, vector<128x128xbf16>, vector<256x128xf32> -> vector<256x128xf32>
    %c0_3 = arith.constant 0 : index
    %c0_4 = arith.constant 0 : index
    %3 = vector.load %arg3[%c0_3, %c0_4] : memref<1x128xf32, #tpu.memory_space<vmem>>, vector<1x128xf32>
    %4 = vector.broadcast %3 : vector<1x128xf32> to vector<256x128xf32>
    %5 = arith.addf %2, %4 : vector<256x128xf32>
    %cst_5 = arith.constant 0.000000e+00 : f32
    %6 = vector.broadcast %cst_5 : f32 to vector<256x128xf32>
    %7 = arith.maximumf %5, %6 : vector<256x128xf32>
    %8 = arith.truncf %7 : vector<256x128xf32> to vector<256x128xbf16>
    %c0_6 = arith.constant 0 : index
    %c0_7 = arith.constant 0 : index
    %9 = vector.load %arg4[%c0_6, %c0_7] : memref<128x256xbf16, #tpu.memory_space<vmem>>, vector<128x256xbf16>
    %cst_8 = arith.constant dense<0.000000e+00> : vector<256x256xf32>
    %10 = tpu.matmul %8, %9, %cst_8 {dimension_numbers = #tpu.dot_dimension_numbers<[1], [0], [0], [1], [0, 0, 1, 1], [], []>} : vector<256x128xbf16>, vector<128x256xbf16>, vector<256x256xf32> -> vector<256x256xf32>
    %c0_9 = arith.constant 0 : index
    %c0_10 = arith.constant 0 : index
    %11 = vector.load %arg5[%c0_9, %c0_10] : memref<1x256xf32, #tpu.memory_space<vmem>>, vector<1x256xf32>
    %12 = vector.broadcast %11 : vector<1x256xf32> to vector<256x256xf32>
    %13 = arith.addf %10, %12 : vector<256x256xf32>
    %14 = vector.extract_strided_slice %13 {offsets = [0, 0], sizes = [256, 128], strides = [1, 1]} : vector<256x256xf32> to vector<256x128xf32>
    %c0_11 = arith.constant 0 : index
    %c0_12 = arith.constant 0 : index
    %15 = vector.load %arg6[%c0_11, %c0_12] : memref<256x128xf32, #tpu.memory_space<vmem>>, vector<256x128xf32>
    tpu.vector_store %arg6[%c0_11, %c0_12], %14 {strides = array<i32>} : memref<256x128xf32, #tpu.memory_space<vmem>>, vector<256x128xf32>,
    %16 = vector.extract_strided_slice %13 {offsets = [0, 128], sizes = [256, 128], strides = [1, 1]} : vector<256x256xf32> to vector<256x128xf32>
    %c0_13 = arith.constant 0 : index
    %c0_14 = arith.constant 0 : index
    %17 = vector.load %arg7[%c0_13, %c0_14] : memref<256x128xf32, #tpu.memory_space<vmem>>, vector<256x128xf32>
    tpu.vector_store %arg7[%c0_13, %c0_14], %16 {strides = array<i32>} : memref<256x128xf32, #tpu.memory_space<vmem>>, vector<256x128xf32>,
    return
  }
  func.func @transform_0(%arg0: i32) -> (i32, i32) {
    %c0_i32 = arith.constant 0 : i32
    %c0_i32_0 = arith.constant 0 : i32
    return %arg0, %c0_i32 : i32, i32
  }
  func.func @transform_1(%arg0: i32) -> (i32, i32) {
    %c0_i32 = arith.constant 0 : i32
    %c0_i32_0 = arith.constant 0 : i32
    %c0_i32_1 = arith.constant 0 : i32
    return %c0_i32, %c0_i32_0 : i32, i32
  }
  func.func @transform_2(%arg0: i32) -> (i32, i32) {
    %c0_i32 = arith.constant 0 : i32
    %c0_i32_0 = arith.constant 0 : i32
    %c0_i32_1 = arith.constant 0 : i32
    return %c0_i32, %c0_i32_0 : i32, i32
  }
  func.func @transform_3(%arg0: i32) -> (i32, i32) {
    %c0_i32 = arith.constant 0 : i32
    %c0_i32_0 = arith.constant 0 : i32
    %c0_i32_1 = arith.constant 0 : i32
    return %c0_i32, %c0_i32_0 : i32, i32
  }
  func.func @transform_4(%arg0: i32) -> (i32, i32) {
    %c0_i32 = arith.constant 0 : i32
    %c0_i32_0 = arith.constant 0 : i32
    %c0_i32_1 = arith.constant 0 : i32
    return %c0_i32, %c0_i32_0 : i32, i32
  }
  func.func @transform_5(%arg0: i32) -> (i32, i32) {
    %c0_i32 = arith.constant 0 : i32
    %c0_i32_0 = arith.constant 0 : i32
    return %arg0, %c0_i32 : i32, i32
  }
  func.func @transform_6(%arg0: i32) -> (i32, i32) {
    %c0_i32 = arith.constant 0 : i32
    %c0_i32_0 = arith.constant 0 : i32
    return %arg0, %c0_i32 : i32, i32
  }
}

module attributes {stable_mosaic.version = 11 : i64} {
  func.func @encoder_kernel(%arg0: i32, %arg1: memref<256x128xbf16, #tpu.memory_space<vmem>>, %arg2: memref<128x128xbf16, #tpu.memory_space<vmem>>, %arg3: memref<1x128xf32, #tpu.memory_space<vmem>>, %arg4: memref<128x256xbf16, #tpu.memory_space<vmem>>, %arg5: memref<1x256xf32, #tpu.memory_space<vmem>>, %arg6: memref<256x128xf32, #tpu.memory_space<vmem>>, %arg7: memref<256x128xf32, #tpu.memory_space<vmem>>) attributes {dimension_semantics = [#tpu.dimension_semantics<parallel>], iteration_bounds = array<i64: 2>, scalar_prefetch = 0 : i64, scratch_operands = 0 : i64, tpu.core_type = #tpu.core_type<tc>, window_params = [{transform_indices = @transform_0, window_bounds = array<i64: 256, 128>}, {pipeline_mode = #tpu.pipeline_mode<synchronous>, transform_indices = @transform_1, window_bounds = array<i64: 128, 128>}, {pipeline_mode = #tpu.pipeline_mode<synchronous>, transform_indices = @transform_2, window_bounds = array<i64: 1, 128>}, {pipeline_mode = #tpu.pipeline_mode<synchronous>, transform_indices = @transform_3, window_bounds = array<i64: 128, 256>}, {pipeline_mode = #tpu.pipeline_mode<synchronous>, transform_indices = @transform_4, window_bounds = array<i64: 1, 256>}, {transform_indices = @transform_5, window_bounds = array<i64: 256, 128>}, {transform_indices = @transform_6, window_bounds = array<i64: 256, 128>}]} {
    %c0 = arith.constant 0 : index
    %c0_0 = arith.constant 0 : index
    %0 = vector.load %arg1[%c0, %c0_0] : memref<256x128xbf16, #tpu.memory_space<vmem>>, vector<256x128xbf16>
    %c0_1 = arith.constant 0 : index
    %c0_2 = arith.constant 0 : index
    %1 = vector.load %arg2[%c0_1, %c0_2] : memref<128x128xbf16, #tpu.memory_space<vmem>>, vector<128x128xbf16>
    %cst = arith.constant dense<0.000000e+00> : vector<256x128xf32>
    %2 = tpu.matmul %0, %1, %cst {dimension_numbers = #tpu.dot_dimension_numbers<[1], [0], [0], [1], [0, 0, 1, 1], [], []>} : vector<256x128xbf16>, vector<128x128xbf16>, vector<256x128xf32> -> vector<256x128xf32>
    %c0_3 = arith.constant 0 : index
    %c0_4 = arith.constant 0 : index
    %3 = vector.load %arg3[%c0_3, %c0_4] : memref<1x128xf32, #tpu.memory_space<vmem>>, vector<1x128xf32>
    %4 = vector.broadcast %3 : vector<1x128xf32> to vector<256x128xf32>
    %5 = arith.addf %2, %4 : vector<256x128xf32>
    %cst_5 = arith.constant 0.000000e+00 : f32
    %6 = vector.broadcast %cst_5 : f32 to vector<256x128xf32>
    %7 = arith.maximumf %5, %6 : vector<256x128xf32>
    %8 = arith.truncf %7 : vector<256x128xf32> to vector<256x128xbf16>
    %c0_6 = arith.constant 0 : index
    %c0_7 = arith.constant 0 : index
    %9 = vector.load %arg4[%c0_6, %c0_7] : memref<128x256xbf16, #tpu.memory_space<vmem>>, vector<128x256xbf16>
    %cst_8 = arith.constant dense<0.000000e+00> : vector<256x256xf32>
    %10 = tpu.matmul %8, %9, %cst_8 {dimension_numbers = #tpu.dot_dimension_numbers<[1], [0], [0], [1], [0, 0, 1, 1], [], []>} : vector<256x128xbf16>, vector<128x256xbf16>, vector<256x256xf32> -> vector<256x256xf32>
    %c0_9 = arith.constant 0 : index
    %c0_10 = arith.constant 0 : index
    %11 = vector.load %arg5[%c0_9, %c0_10] : memref<1x256xf32, #tpu.memory_space<vmem>>, vector<1x256xf32>
    %12 = vector.broadcast %11 : vector<1x256xf32> to vector<256x256xf32>
    %13 = arith.addf %10, %12 : vector<256x256xf32>
    %14 = vector.extract_strided_slice %13 {offsets = [0, 0], sizes = [256, 128], strides = [1, 1]} : vector<256x256xf32> to vector<256x128xf32>
    %c0_11 = arith.constant 0 : index
    %c0_12 = arith.constant 0 : index
    %15 = vector.load %arg6[%c0_11, %c0_12] : memref<256x128xf32, #tpu.memory_space<vmem>>, vector<256x128xf32>
    tpu.vector_store %arg6[%c0_11, %c0_12], %14 {strides = array<i32>} : memref<256x128xf32, #tpu.memory_space<vmem>>, vector<256x128xf32>,
    %16 = vector.extract_strided_slice %13 {offsets = [0, 128], sizes = [256, 128], strides = [1, 1]} : vector<256x256xf32> to vector<256x128xf32>
    %c0_13 = arith.constant 0 : index
    %c0_14 = arith.constant 0 : index
    %17 = vector.load %arg7[%c0_13, %c0_14] : memref<256x128xf32, #tpu.memory_space<vmem>>, vector<256x128xf32>
    tpu.vector_store %arg7[%c0_13, %c0_14], %16 {strides = array<i32>} : memref<256x128xf32, #tpu.memory_space<vmem>>, vector<256x128xf32>,
    return
  }
  func.func @transform_0(%arg0: i32) -> (i32, i32) {
    %c0_i32 = arith.constant 0 : i32
    %c0_i32_0 = arith.constant 0 : i32
    return %arg0, %c0_i32 : i32, i32
  }
  func.func @transform_1(%arg0: i32) -> (i32, i32) {
    %c0_i32 = arith.constant 0 : i32
    %c0_i32_0 = arith.constant 0 : i32
    %c0_i32_1 = arith.constant 0 : i32
    return %c0_i32, %c0_i32_0 : i32, i32
  }
  func.func @transform_2(%arg0: i32) -> (i32, i32) {
    %c0_i32 = arith.constant 0 : i32
    %c0_i32_0 = arith.constant 0 : i32
    %c0_i32_1 = arith.constant 0 : i32
    return %c0_i32, %c0_i32_0 : i32, i32
  }
  func.func @transform_3(%arg0: i32) -> (i32, i32) {
    %c0_i32 = arith.constant 0 : i32
    %c0_i32_0 = arith.constant 0 : i32
    %c0_i32_1 = arith.constant 0 : i32
    return %c0_i32, %c0_i32_0 : i32, i32
  }
  func.func @transform_4(%arg0: i32) -> (i32, i32) {
    %c0_i32 = arith.constant 0 : i32
    %c0_i32_0 = arith.constant 0 : i32
    %c0_i32_1 = arith.constant 0 : i32
    return %c0_i32, %c0_i32_0 : i32, i32
  }
  func.func @transform_5(%arg0: i32) -> (i32, i32) {
    %c0_i32 = arith.constant 0 : i32
    %c0_i32_0 = arith.constant 0 : i32
    return %arg0, %c0_i32 : i32, i32
  }
  func.func @transform_6(%arg0: i32) -> (i32, i32) {
    %c0_i32 = arith.constant 0 : i32
    %c0_i32_0 = arith.constant 0 : i32
    return %arg0, %c0_i32 : i32, i32
  }
}

</mosaic_0001>

<llo_original>
// kernel: tpu_custom_call.1
$region0: #{tpu_custom_call.1}
  #allocation0 [shape = 'u32[]', space=smem, size = 0x4, offset = 0x4, fixed_abs, tag = 'smem constant byte address 0x4 - core index']
  #allocation1 [shape = 'u32[144,128]{1,0:T(1,128)}', space=vmem, size = 0x12000, scoped, tag = 'internal scratch']
  %s0 = inlined_call_operand.hbm [shape: bf16[512,128], index: 0, kind: input, shape index: {}]
  %s1 = inlined_call_operand.hbm [shape: bf16[128,128], index: 1, kind: input, shape index: {}]
  %s2 = inlined_call_operand.vmem [shape: f32[1,128], index: 2, kind: input, shape index: {}]
  %s3 = inlined_call_operand.hbm [shape: bf16[128,256], index: 3, kind: input, shape index: {}]
  %s4 = inlined_call_operand.vmem [shape: f32[1,256], index: 4, kind: input, shape index: {}]
  %s5 = inlined_call_operand.hbm [shape: f32[512,128], index: 5, kind: output, shape index: {0}]
  %s6 = inlined_call_operand.hbm [shape: f32[512,128], index: 6, kind: output, shape index: {1}]
  %7 = xla_tuple %s5, %s6
  %s8 = sld [smem:[#allocation0]]
  $region73: #{tpu_custom_call.1} parent=0
    _
  %s10 = ssub.s32 1, %s8
  %s11 = scalar_select 0, %s10, %s8
  $region1: #{tpu_custom_call.1} parent=0
    #allocation2 [shape = 'u8[131072]{0}', space=vmem, size = 0x20000, scoped, tag = 'input window, operand 0']
    #allocation3 [shape = 's32[2]{0}', space=sflag, size = 0x8, scoped, tag = 'scoped memory for tpu_custom_call.1']
    #allocation4 [shape = 's32[2]{0}', space=sflag, size = 0x8, scoped, tag = 'scoped memory for tpu_custom_call.1']
    #allocation5 [shape = 'u8[32768]{0}', space=vmem, size = 0x8000, scoped, tag = 'input window, operand 1, single buffered']
    #allocation6 [shape = 's32[1]{0}', space=sflag, size = 0x4, scoped, tag = 'scoped memory for tpu_custom_call.1']
    #allocation7 [shape = 'u8[65536]{0}', space=vmem, size = 0x10000, scoped, tag = 'input window, operand 3, single buffered']
    #allocation8 [shape = 'u8[262144]{0}', space=vmem, size = 0x40000, scoped, tag = 'output window, operand 0']
    #allocation9 [shape = 'u8[262144]{0}', space=vmem, size = 0x40000, scoped, tag = 'output window, operand 1']
    #allocation10 [shape = 's32[2]{0}', space=sflag, size = 0x8, scoped, tag = 'scoped memory for tpu_custom_call.1']
    %12 = vsyncpa [#allocation3], 0
    %s13 = scalar_lea.sflag [#allocation3], 1
    %14 = vsyncpa %s13, 0
    %15 = vsyncpa [#allocation6], 0
    %16 = vsyncpa [#allocation4], 0
    %s17 = scalar_lea.sflag [#allocation4], 1
    %18 = vsyncpa %s17, 0
    %19 = vsyncpa [#allocation10], 0
    %s20 = scalar_lea.sflag [#allocation10], 1
    %21 = vsyncpa %s20, 0
    loop: start=0, step=1, limit=4
    $region2: #{tpu_custom_call.1} parent=1 // loop_pre_header
      _
    $region3: #{tpu_custom_call.1} parent=1 // loop_header
      %s23 = sphi 0, %s27
      %p24 = scmp.ge.s32.totalorder %s23, 4
      %s33 = sphi 0, %s35
      %s36 = sphi 0, %s33
      %s37 = sphi 0, %s36
      %s53 = sphi 0, %s37
      %s57 = sphi 0, %s57
      %s59 = sphi 0, %s57
      %s60 = sphi 0, %s59
      %s74 = sphi 0, %s60
      %s78 = sphi 0, %s78
      %s80 = sphi 0, %s78
      %s81 = sphi 0, %s80
      %s95 = sphi 0, %s81
      %s99 = sphi 0, %s99
      %s101 = sphi 0, %s99
      %s102 = sphi 0, %s101
      %s116 = sphi 0, %s102
      %s120 = sphi 0, %s120
      %s122 = sphi 0, %s120
      %s123 = sphi 0, %s122
      %s137 = sphi 0, %s123
      %s143 = sphi 0, %s145
      %s146 = sphi 0, %s143
      %s147 = sphi 0, %s146
      %s163 = sphi 0, %s147
      %s169 = sphi 0, %s171
      %s172 = sphi 0, %s169
      %s173 = sphi 0, %s172
      %s189 = sphi 0, %s173
    $region4: #{tpu_custom_call.1} parent=1 // loop_header_branch
      %26 = sbr.rel (%p24) target = $region8
    $region5: #{tpu_custom_call.1} parent=1 // loop_body
      %s28 = ssub.s32 %s23, 1
      %s29 = ssub.s32 %s23, 2
      %s30 = sadd.s32 %s23, 1
      %s31 = ssub.s32 %s23, %s30
      %p32 = scmp.eq.s32.totalorder %s31, 0
      %s34 = sadd.s32 %s33, 1
      %s35 = scalar_select %p32, %s33, %s34
      %p38 = pneg %p32
      %p39 = scmp.eq.s32.totalorder %s23, 1
      %p40 = por %p38, %p39
      %p41 = scmp.ne.s32.totalorder %s33, %s36
      %p42 = scmp.eq.s32.totalorder %s23, 0
      %p43 = por %p41, %p42
      %p44 = scmp.ne.s32.totalorder %s33, %s36
      %p45 = scmp.eq.s32.totalorder %s28, 1
      %p46 = por %p44, %p45
      %p47 = scmp.ne.s32.totalorder %s36, %s37
      %p48 = scmp.eq.s32.totalorder %s28, 0
      %p49 = por %p47, %p48
      %p50 = scmp.ne.s32.totalorder %s36, %s37
      %p51 = scmp.eq.s32.totalorder %s29, 1
      %p52 = por %p50, %p51
      %p54 = scmp.ne.s32.totalorder %s37, %s53
      %p55 = scmp.eq.s32.totalorder %s29, 0
      %p56 = por %p54, %p55
      %s58 = sadd.s32 %s57, 1
      %p61 = scmp.eq.s32.totalorder %s23, 1
      %p62 = scmp.ne.s32.totalorder %s57, %s59
      %p63 = scmp.eq.s32.totalorder %s23, 0
      %p64 = por %p62, %p63
      %p65 = scmp.ne.s32.totalorder %s57, %s59
      %p66 = scmp.eq.s32.totalorder %s28, 1
      %p67 = por %p65, %p66
      %p68 = scmp.ne.s32.totalorder %s59, %s60
      %p69 = scmp.eq.s32.totalorder %s28, 0
      %p70 = por %p68, %p69
      %p71 = scmp.ne.s32.totalorder %s59, %s60
      %p72 = scmp.eq.s32.totalorder %s29, 1
      %p73 = por %p71, %p72
      %p75 = scmp.ne.s32.totalorder %s60, %s74
      %p76 = scmp.eq.s32.totalorder %s29, 0
      %p77 = por %p75, %p76
      %s79 = sadd.s32 %s78, 1
      %p82 = scmp.eq.s32.totalorder %s23, 1
      %p83 = scmp.ne.s32.totalorder %s78, %s80
      %p84 = scmp.eq.s32.totalorder %s23, 0
      %p85 = por %p83, %p84
      %p86 = scmp.ne.s32.totalorder %s78, %s80
      %p87 = scmp.eq.s32.totalorder %s28, 1
      %p88 = por %p86, %p87
      %p89 = scmp.ne.s32.totalorder %s80, %s81
      %p90 = scmp.eq.s32.totalorder %s28, 0
      %p91 = por %p89, %p90
      %p92 = scmp.ne.s32.totalorder %s80, %s81
      %p93 = scmp.eq.s32.totalorder %s29, 1
      %p94 = por %p92, %p93
      %p96 = scmp.ne.s32.totalorder %s81, %s95
      %p97 = scmp.eq.s32.totalorder %s29, 0
      %p98 = por %p96, %p97
      %s100 = sadd.s32 %s99, 1
      %p103 = scmp.eq.s32.totalorder %s23, 1
      %p104 = scmp.ne.s32.totalorder %s99, %s101
      %p105 = scmp.eq.s32.totalorder %s23, 0
      %p106 = por %p104, %p105
      %p107 = scmp.ne.s32.totalorder %s99, %s101
      %p108 = scmp.eq.s32.totalorder %s28, 1
      %p109 = por %p107, %p108
      %p110 = scmp.ne.s32.totalorder %s101, %s102
      %p111 = scmp.eq.s32.totalorder %s28, 0
      %p112 = por %p110, %p111
      %p113 = scmp.ne.s32.totalorder %s101, %s102
      %p114 = scmp.eq.s32.totalorder %s29, 1
      %p115 = por %p113, %p114
      %p117 = scmp.ne.s32.totalorder %s102, %s116
      %p118 = scmp.eq.s32.totalorder %s29, 0
      %p119 = por %p117, %p118
      %s121 = sadd.s32 %s120, 1
      %p124 = scmp.eq.s32.totalorder %s23, 1
      %p125 = scmp.ne.s32.totalorder %s120, %s122
      %p126 = scmp.eq.s32.totalorder %s23, 0
      %p127 = por %p125, %p126
      %p128 = scmp.ne.s32.totalorder %s120, %s122
      %p129 = scmp.eq.s32.totalorder %s28, 1
      %p130 = por %p128, %p129
      %p131 = scmp.ne.s32.totalorder %s122, %s123
      %p132 = scmp.eq.s32.totalorder %s28, 0
      %p133 = por %p131, %p132
      %p134 = scmp.ne.s32.totalorder %s122, %s123
      %p135 = scmp.eq.s32.totalorder %s29, 1
      %p136 = por %p134, %p135
      %p138 = scmp.ne.s32.totalorder %s123, %s137
      %p139 = scmp.eq.s32.totalorder %s29, 0
      %p140 = por %p138, %p139
      %s141 = ssub.s32 %s23, %s30
      %p142 = scmp.eq.s32.totalorder %s141, 0
      %s144 = sadd.s32 %s143, 1
      %s145 = scalar_select %p142, %s143, %s144
      %p148 = pneg %p142
      %p149 = scmp.eq.s32.totalorder %s23, 1
      %p150 = por %p148, %p149
      %p151 = scmp.ne.s32.totalorder %s143, %s146
      %p152 = scmp.eq.s32.totalorder %s23, 0
      %p153 = por %p151, %p152
      %p154 = scmp.ne.s32.totalorder %s143, %s146
      %p155 = scmp.eq.s32.totalorder %s28, 1
      %p156 = por %p154, %p155
      %p157 = scmp.ne.s32.totalorder %s146, %s147
      %p158 = scmp.eq.s32.totalorder %s28, 0
      %p159 = por %p157, %p158
      %p160 = scmp.ne.s32.totalorder %s146, %s147
      %p161 = scmp.eq.s32.totalorder %s29, 1
      %p162 = por %p160, %p161
      %p164 = scmp.ne.s32.totalorder %s147, %s163
      %p165 = scmp.eq.s32.totalorder %s29, 0
      %p166 = por %p164, %p165
      %s167 = ssub.s32 %s23, %s30
      %p168 = scmp.eq.s32.totalorder %s167, 0
      %s170 = sadd.s32 %s169, 1
      %s171 = scalar_select %p168, %s169, %s170
      %p174 = pneg %p168
      %p175 = scmp.eq.s32.totalorder %s23, 1
      %p176 = por %p174, %p175
      %p177 = scmp.ne.s32.totalorder %s169, %s172
      %p178 = scmp.eq.s32.totalorder %s23, 0
      %p179 = por %p177, %p178
      %p180 = scmp.ne.s32.totalorder %s169, %s172
      %p181 = scmp.eq.s32.totalorder %s28, 1
      %p182 = por %p180, %p181
      %p183 = scmp.ne.s32.totalorder %s172, %s173
      %p184 = scmp.eq.s32.totalorder %s28, 0
      %p185 = por %p183, %p184
      %p186 = scmp.ne.s32.totalorder %s172, %s173
      %p187 = scmp.eq.s32.totalorder %s29, 1
      %p188 = por %p186, %p187
      %p190 = scmp.ne.s32.totalorder %s173, %s189
      %p191 = scmp.eq.s32.totalorder %s29, 0
      %p192 = por %p190, %p191
      %p193 = scmp.le.s32.totalorder 1, %s23
      %p194 = scmp.lt.s32.totalorder %s23, 3
      %p195 = pnand %p193, %p194
      %p196 = pneg %p195
      // Predicated region
      $region9: #{tpu_custom_call.1} parent=5 // pred_check
        _
      $region10: #{tpu_custom_call.1} parent=5 // pred_check_branch
        %198 = sbr.rel (%p195) target = $region12
      $region11: #{tpu_custom_call.1} parent=5 // pred_region
        %s199 = ssub.s32 %s23, 1
        // Predicated region
        $region13: #{tpu_custom_call.1} parent=11 // pred_check
          %p200 = pneg %p70
        $region14: #{tpu_custom_call.1} parent=11 // pred_check_branch
          %202 = sbr.rel (%p200) target = $region16
        $region15: #{tpu_custom_call.1} parent=11 // pred_region
          %s204 = ssub.s32 1024, 1024
          %205 = vsyncadd [#allocation6], %s204
          %s206 = sshll.u32 [#allocation5], 4
          %s207 = int_to_ptr.vmem [resolvable:$true] %s206
          %212 = dma.hbm_to_vmem [thread:$0]  %s1, 1024, %s207, [#allocation6], 64, 64, 4
        $region16: #{tpu_custom_call.1} parent=11 // pred_fallthru
          _
        // Predicated region
        $region17: #{tpu_custom_call.1} parent=11 // pred_check
          %p213 = pneg %p91
        $region18: #{tpu_custom_call.1} parent=11 // pred_check_branch
          %215 = sbr.rel (%p213) target = $region20
        $region19: #{tpu_custom_call.1} parent=11 // pred_region
          _
        $region20: #{tpu_custom_call.1} parent=11 // pred_fallthru
          _
        // Predicated region
        $region21: #{tpu_custom_call.1} parent=11 // pred_check
          %p216 = pneg %p112
        $region22: #{tpu_custom_call.1} parent=11 // pred_check_branch
          %218 = sbr.rel (%p216) target = $region24
        $region23: #{tpu_custom_call.1} parent=11 // pred_region
          %s220 = ssub.s32 2048, 2048
          %221 = vsyncadd [#allocation6], %s220
          %s222 = sshll.u32 [#allocation7], 4
          %s223 = int_to_ptr.vmem [resolvable:$true] %s222
          %228 = dma.hbm_to_vmem [thread:$0]  %s3, 2048, %s223, [#allocation6], 128, 128, 8
        $region24: #{tpu_custom_call.1} parent=11 // pred_fallthru
          _
        // Predicated region
        $region25: #{tpu_custom_call.1} parent=11 // pred_check
          %p229 = pneg %p133
        $region26: #{tpu_custom_call.1} parent=11 // pred_check_branch
          %231 = sbr.rel (%p229) target = $region28
        $region27: #{tpu_custom_call.1} parent=11 // pred_region
          _
        $region28: #{tpu_custom_call.1} parent=11 // pred_fallthru
          _
      $region12: #{tpu_custom_call.1} parent=5 // pred_fallthru
        _
      %p232 = scmp.lt.s32.totalorder %s23, 2
      // Predicated region
      $region29: #{tpu_custom_call.1} parent=5 // pred_check
        %p233 = pneg %p232
      $region30: #{tpu_custom_call.1} parent=5 // pred_check_branch
        %235 = sbr.rel (%p233) target = $region32
      $region31: #{tpu_custom_call.1} parent=5 // pred_region
        // Predicated region
        $region33: #{tpu_custom_call.1} parent=31 // pred_check
          %p236 = pneg %p43
        $region34: #{tpu_custom_call.1} parent=31 // pred_check_branch
          %238 = sbr.rel (%p236) target = $region36
        $region35: #{tpu_custom_call.1} parent=31 // pred_region
          %s239 = sand.u32 %s33, 1
          %s240 = scalar_lea.sflag [#allocation3], %s239
          %s241 = sand.u32 %s33, 1
          %s242 = smul.addr %s241, 128
          %s243 = scalar_lea.vmem [#allocation2], %s242
          %s244 = smul.u32 32, %s23
          %s246 = ssub.s32 2048, 2048
          %247 = vsyncadd %s240, %s246
          %s248 = smul.addr %s244, 64
          %s249 = scalar_lea.hbm %s0, %s248
          %s250 = sshll.u32 %s243, 4
          %s251 = int_to_ptr.vmem [resolvable:$true] %s250
          %256 = dma.hbm_to_vmem [thread:$0]  %s249, 2048, %s251, %s240, 64, 64, 4
        $region36: #{tpu_custom_call.1} parent=31 // pred_fallthru
          _
      $region32: #{tpu_custom_call.1} parent=5 // pred_fallthru
        _
      %p257 = scmp.le.s32.totalorder 1, %s23
      %p258 = scmp.lt.s32.totalorder %s23, 3
      %p259 = pnand %p257, %p258
      %p260 = pneg %p259
      // Predicated region
      $region37: #{tpu_custom_call.1} parent=5 // pred_check
        _
      $region38: #{tpu_custom_call.1} parent=5 // pred_check_branch
        %262 = sbr.rel (%p259) target = $region40
      $region39: #{tpu_custom_call.1} parent=5 // pred_region
        %s263 = ssub.s32 %s23, 1
        %s264 = sand.u32 %s36, 1
        %s265 = scalar_lea.sflag [#allocation3], %s264
        %s266 = sand.u32 %s36, 1
        %s267 = smul.addr %s266, 128
        %s268 = scalar_lea.vmem [#allocation2], %s267
        // Predicated region
        $region41: #{tpu_custom_call.1} parent=39 // pred_check
          %p269 = pneg %p49
        $region42: #{tpu_custom_call.1} parent=39 // pred_check_branch
          %271 = sbr.rel (%p269) target = $region44
        $region43: #{tpu_custom_call.1} parent=39 // pred_region
          %272 = dma.done %s265, 2048
        $region44: #{tpu_custom_call.1} parent=39 // pred_fallthru
          _
        // Predicated region
        $region45: #{tpu_custom_call.1} parent=39 // pred_check
          %p273 = pneg %p70
        $region46: #{tpu_custom_call.1} parent=39 // pred_check_branch
          %275 = sbr.rel (%p273) target = $region48
        $region47: #{tpu_custom_call.1} parent=39 // pred_region
          %276 = dma.done [#allocation6], 1024
        $region48: #{tpu_custom_call.1} parent=39 // pred_fallthru
          _
        // Predicated region
        $region49: #{tpu_custom_call.1} parent=39 // pred_check
          %p277 = pneg %p112
        $region50: #{tpu_custom_call.1} parent=39 // pred_check_branch
          %279 = sbr.rel (%p277) target = $region52
        $region51: #{tpu_custom_call.1} parent=39 // pred_region
          %280 = dma.done [#allocation6], 2048
        $region52: #{tpu_custom_call.1} parent=39 // pred_fallthru
          _
        %s281 = sand.u32 %s36, 1
        %s282 = scalar_lea.sflag [#allocation3], %s281
        %s283 = sand.u32 %s36, 1
        %s284 = smul.addr %s283, 128
        %s285 = scalar_lea.vmem [#allocation2], %s284
        %p286 = pneg %p49
        %p287 = pneg %p46
        %p288 = pneg %p70
        %p289 = pneg %p67
        %p290 = pneg %p91
        %p291 = pneg %p88
        %p292 = pneg %p112
        %p293 = pneg %p109
        %p294 = pneg %p133
        %p295 = pneg %p130
        %p296 = pneg %p159
        %p297 = pneg %p156
        %s298 = sand.u32 %s146, 1
        %s299 = scalar_lea.sflag [#allocation4], %s298
        %s300 = sand.u32 %s146, 1
        %s301 = smul.addr %s300, 256
        %s302 = scalar_lea.vmem [#allocation8], %s301
        %p303 = pneg %p185
        %p304 = pneg %p182
        %s305 = sand.u32 %s172, 1
        %s306 = scalar_lea.sflag [#allocation10], %s305
        %s307 = sand.u32 %s172, 1
        %s308 = smul.addr %s307, 256
        %s309 = scalar_lea.vmem [#allocation9], %s308
        %s310 = smul.u32 32, %s28
        %s311 = smul.u32 32, %s28
        %s312 = smul.u32 32, %s28
        %v314 = vld [vmem:[%s268] sm:$0xf]
        %v315 = vld [vmem:[%s268 + $0x4] sm:$0xf]
        %v316 = vld [vmem:[%s268 + $0x8] sm:$0xf]
        %v317 = vld [vmem:[%s268 + $0xc] sm:$0xf]
        %v318 = vld [vmem:[%s268 + $0x10] sm:$0xf]
        %v319 = vld [vmem:[%s268 + $0x14] sm:$0xf]
        %v320 = vld [vmem:[%s268 + $0x18] sm:$0xf]
        %v321 = vld [vmem:[%s268 + $0x1c] sm:$0xf]
        %v322 = vld [vmem:[%s268 + $0x20] sm:$0xf]
        %v323 = vld [vmem:[%s268 + $0x24] sm:$0xf]
        %v324 = vld [vmem:[%s268 + $0x28] sm:$0xf]
        %v325 = vld [vmem:[%s268 + $0x2c] sm:$0xf]
        %v326 = vld [vmem:[%s268 + $0x30] sm:$0xf]
        %v327 = vld [vmem:[%s268 + $0x34] sm:$0xf]
        %v328 = vld [vmem:[%s268 + $0x38] sm:$0xf]
        %v329 = vld [vmem:[%s268 + $0x3c] sm:$0xf]
        %v330 = vld [vmem:[%s268 + $0x40] sm:$0xf]
        %v331 = vld [vmem:[%s268 + $0x44] sm:$0xf]
        %v332 = vld [vmem:[%s268 + $0x48] sm:$0xf]
        %v333 = vld [vmem:[%s268 + $0x4c] sm:$0xf]
        %v334 = vld [vmem:[%s268 + $0x50] sm:$0xf]
        %v335 = vld [vmem:[%s268 + $0x54] sm:$0xf]
        %v336 = vld [vmem:[%s268 + $0x58] sm:$0xf]
        %v337 = vld [vmem:[%s268 + $0x5c] sm:$0xf]
        %v338 = vld [vmem:[%s268 + $0x60] sm:$0xf]
        %v339 = vld [vmem:[%s268 + $0x64] sm:$0xf]
        %v340 = vld [vmem:[%s268 + $0x68] sm:$0xf]
        %v341 = vld [vmem:[%s268 + $0x6c] sm:$0xf]
        %v342 = vld [vmem:[%s268 + $0x70] sm:$0xf]
        %v343 = vld [vmem:[%s268 + $0x74] sm:$0xf]
        %v344 = vld [vmem:[%s268 + $0x78] sm:$0xf]
        %v345 = vld [vmem:[%s268 + $0x7c] sm:$0xf]
        %v346 = vld [vmem:[#allocation5] sm:$0xf]
        %v347 = vld [vmem:[#allocation5 + $0x4] sm:$0xf]
        %v348 = vld [vmem:[#allocation5 + $0x8] sm:$0xf]
        %v349 = vld [vmem:[#allocation5 + $0xc] sm:$0xf]
        %v350 = vld [vmem:[#allocation5 + $0x10] sm:$0xf]
        %v351 = vld [vmem:[#allocation5 + $0x14] sm:$0xf]
        %v352 = vld [vmem:[#allocation5 + $0x18] sm:$0xf]
        %v353 = vld [vmem:[#allocation5 + $0x1c] sm:$0xf]
        %v354 = vld [vmem:[#allocation5 + $0x20] sm:$0xf]
        %v355 = vld [vmem:[#allocation5 + $0x24] sm:$0xf]
        %v356 = vld [vmem:[#allocation5 + $0x28] sm:$0xf]
        %v357 = vld [vmem:[#allocation5 + $0x2c] sm:$0xf]
        %v358 = vld [vmem:[#allocation5 + $0x30] sm:$0xf]
        %v359 = vld [vmem:[#allocation5 + $0x34] sm:$0xf]
        %v360 = vld [vmem:[#allocation5 + $0x38] sm:$0xf]
        %v361 = vld [vmem:[#allocation5 + $0x3c] sm:$0xf]
        %v362 = vld [vmem:[%s2] sm:$0x1]
        %v364 = vlaneseq
        %v365 = vshrl.u32 %v364, 7
        %v366 = vsub.s32 0, %v365
        %v367 = vrot.slane %v362, %v366
        %v401 = vunpack.c.l.b16 %v314
        %v402 = vunpack.c.l.b16 %v315
        %v403 = vunpack.c.l.b16 %v316
        %v404 = vunpack.c.l.b16 %v317
        %v405 = vunpack.c.l.b16 %v318
        %v406 = vunpack.c.l.b16 %v319
        %v407 = vunpack.c.l.b16 %v320
        %v408 = vunpack.c.l.b16 %v321
        %v409 = vunpack.c.l.b16 %v322
        %v410 = vunpack.c.l.b16 %v323
        %v411 = vunpack.c.l.b16 %v324
        %v412 = vunpack.c.l.b16 %v325
        %v413 = vunpack.c.l.b16 %v326
        %v414 = vunpack.c.l.b16 %v327
        %v415 = vunpack.c.l.b16 %v328
        %v416 = vunpack.c.l.b16 %v329
        %v417 = vunpack.c.l.b16 %v330
        %v418 = vunpack.c.l.b16 %v331
        %v419 = vunpack.c.l.b16 %v332
        %v420 = vunpack.c.l.b16 %v333
        %v421 = vunpack.c.l.b16 %v334
        %v422 = vunpack.c.l.b16 %v335
        %v423 = vunpack.c.l.b16 %v336
        %v424 = vunpack.c.l.b16 %v337
        %v425 = vunpack.c.l.b16 %v338
        %v426 = vunpack.c.l.b16 %v339
        %v427 = vunpack.c.l.b16 %v340
        %v428 = vunpack.c.l.b16 %v341
        %v429 = vunpack.c.l.b16 %v342
        %v430 = vunpack.c.l.b16 %v343
        %v431 = vunpack.c.l.b16 %v344
        %v432 = vunpack.c.l.b16 %v345
        %v433 = vpack.c.b16 %v402, %v401
        %v434 = vpack.c.b16 %v404, %v403
        %v435 = vpack.c.b16 %v406, %v405
        %v436 = vpack.c.b16 %v408, %v407
        %v437 = vpack.c.b16 %v410, %v409
        %v438 = vpack.c.b16 %v412, %v411
        %v439 = vpack.c.b16 %v414, %v413
        %v440 = vpack.c.b16 %v416, %v415
        %v441 = vpack.c.b16 %v418, %v417
        %v442 = vpack.c.b16 %v420, %v419
        %v443 = vpack.c.b16 %v422, %v421
        %v444 = vpack.c.b16 %v424, %v423
        %v445 = vpack.c.b16 %v426, %v425
        %v446 = vpack.c.b16 %v428, %v427
        %v447 = vpack.c.b16 %v430, %v429
        %v448 = vpack.c.b16 %v432, %v431
        %v481 = vunpack.c.l.b16 %v346
        %v482 = vunpack.c.l.b16 %v347
        %v483 = vunpack.c.l.b16 %v348
        %v484 = vunpack.c.l.b16 %v349
        %v485 = vunpack.c.l.b16 %v350
        %v486 = vunpack.c.l.b16 %v351
        %v487 = vunpack.c.l.b16 %v352
        %v488 = vunpack.c.l.b16 %v353
        %v489 = vunpack.c.l.b16 %v354
        %v490 = vunpack.c.l.b16 %v355
        %v491 = vunpack.c.l.b16 %v356
        %v492 = vunpack.c.l.b16 %v357
        %v493 = vunpack.c.l.b16 %v358
        %v494 = vunpack.c.l.b16 %v359
        %v495 = vunpack.c.l.b16 %v360
        %v496 = vunpack.c.l.b16 %v361
        %v497 = vpack.c.b16 %v482, %v481
        %v498 = vpack.c.b16 %v484, %v483
        %v499 = vpack.c.b16 %v486, %v485
        %v500 = vpack.c.b16 %v488, %v487
        %v501 = vpack.c.b16 %v490, %v489
        %v502 = vpack.c.b16 %v492, %v491
        %v503 = vpack.c.b16 %v494, %v493
        %v504 = vpack.c.b16 %v496, %v495
        %513 = vmatprep.subr.bf16.mxu0 0
        %514 = vmatpush1.bf16.msra.mxu0 %v497
        %515 = vmatprep.subr.bf16.mxu0 0
        %516 = vmatpush1.bf16.msra.mxu0 %v498
        %517 = vmatprep.subr.bf16.mxu0 0
        %518 = vmatpush1.bf16.msra.mxu0 %v499
        %519 = vmatprep.subr.bf16.mxu0 0
        %520 = vmatpush1.bf16.msra.mxu0 %v500
        %521 = vmatprep.subr.bf16.mxu0 0
        %522 = vmatpush1.bf16.msra.mxu0 %v501
        %523 = vmatprep.subr.bf16.mxu0 0
        %524 = vmatpush1.bf16.msra.mxu0 %v502
        %525 = vmatprep.subr.bf16.mxu0 0
        %526 = vmatpush1.bf16.msra.mxu0 %v503
        %527 = vmatprep.subr.bf16.mxu0 0
        %528 = vmatpush1.bf16.msra.mxu0 %v504
        %529 = vmatprep.subr.bf16.mxu0 0
        %530 = vmatpush1.bf16.msra.mxu0 0
        %531 = vmatprep.subr.bf16.mxu0 0
        %532 = vmatpush1.bf16.msra.mxu0 0
        %533 = vmatprep.subr.bf16.mxu0 0
        %534 = vmatpush1.bf16.msra.mxu0 0
        %535 = vmatprep.subr.bf16.mxu0 0
        %536 = vmatpush1.bf16.msra.mxu0 0
        %537 = vmatprep.subr.bf16.mxu0 0
        %538 = vmatpush1.bf16.msra.mxu0 0
        %539 = vmatprep.subr.bf16.mxu0 0
        %540 = vmatpush1.bf16.msra.mxu0 0
        %541 = vmatprep.subr.bf16.mxu0 0
        %542 = vmatpush1.bf16.msra.mxu0 0
        %543 = vmatprep.subr.bf16.mxu0 0
        %544 = vmatpush1.bf16.msra.mxu0 0
        %545 = vmatprep.mubr.bf16.mxu0 0
        %546 = vmatmul.mubr.bf16.gmra.mrb[0].mxu0 %v433
        %v547 = vpop.f32.mrb[0].mxu0
        %v548 = vadd.f32 %v367, %v547
        %v549 = vpop.f32.mrb[0].mxu0
        %v550 = vpop.f32.mrb[0].mxu0
        %v551 = vadd.f32 %v367, %v550
        %v552 = vpop.f32.mrb[0].mxu0
        %553 = vmatprep.mubr.bf16.mxu0 0
        %554 = vmatmul.mubr.bf16.gmra.mrb[0].mxu0 %v434
        %v555 = vpop.f32.mrb[0].mxu0
        %v556 = vadd.f32 %v367, %v555
        %v557 = vpop.f32.mrb[0].mxu0
        %v558 = vpop.f32.mrb[0].mxu0
        %v559 = vadd.f32 %v367, %v558
        %v560 = vpop.f32.mrb[0].mxu0
        %561 = vmatprep.mubr.bf16.mxu0 0
        %562 = vmatmul.mubr.bf16.gmra.mrb[0].mxu0 %v435
        %v563 = vpop.f32.mrb[0].mxu0
        %v564 = vadd.f32 %v367, %v563
        %v565 = vpop.f32.mrb[0].mxu0
        %v566 = vpop.f32.mrb[0].mxu0
        %v567 = vadd.f32 %v367, %v566
        %v568 = vpop.f32.mrb[0].mxu0
        %569 = vmatprep.mubr.bf16.mxu0 0
        %570 = vmatmul.mubr.bf16.gmra.mrb[0].mxu0 %v436
        %v571 = vpop.f32.mrb[0].mxu0
        %v572 = vadd.f32 %v367, %v571
        %v573 = vpop.f32.mrb[0].mxu0
        %v574 = vpop.f32.mrb[0].mxu0
        %v575 = vadd.f32 %v367, %v574
        %v576 = vpop.f32.mrb[0].mxu0
        %577 = vmatprep.mubr.bf16.mxu0 0
        %578 = vmatmul.mubr.bf16.gmra.mrb[0].mxu0 %v437
        %v579 = vpop.f32.mrb[0].mxu0
        %v580 = vadd.f32 %v367, %v579
        %v581 = vpop.f32.mrb[0].mxu0
        %v582 = vpop.f32.mrb[0].mxu0
        %v583 = vadd.f32 %v367, %v582
        %v584 = vpop.f32.mrb[0].mxu0
        %585 = vmatprep.mubr.bf16.mxu0 0
        %586 = vmatmul.mubr.bf16.gmra.mrb[0].mxu0 %v438
        %v587 = vpop.f32.mrb[0].mxu0
        %v588 = vadd.f32 %v367, %v587
        %v589 = vpop.f32.mrb[0].mxu0
        %v590 = vpop.f32.mrb[0].mxu0
        %v591 = vadd.f32 %v367, %v590
        %v592 = vpop.f32.mrb[0].mxu0
        %593 = vmatprep.mubr.bf16.mxu0 0
        %594 = vmatmul.mubr.bf16.gmra.mrb[0].mxu0 %v439
        %v595 = vpop.f32.mrb[0].mxu0
        %v596 = vadd.f32 %v367, %v595
        %v597 = vpop.f32.mrb[0].mxu0
        %v598 = vpop.f32.mrb[0].mxu0
        %v599 = vadd.f32 %v367, %v598
        %v600 = vpop.f32.mrb[0].mxu0
        %601 = vmatprep.mubr.bf16.mxu0 0
        %602 = vmatmul.mubr.bf16.gmra.mrb[0].mxu0 %v440
        %v603 = vpop.f32.mrb[0].mxu0
        %v604 = vadd.f32 %v367, %v603
        %v605 = vpop.f32.mrb[0].mxu0
        %v606 = vpop.f32.mrb[0].mxu0
        %v607 = vadd.f32 %v367, %v606
        %v608 = vpop.f32.mrb[0].mxu0
        %609 = vmatprep.mubr.bf16.mxu0 0
        %610 = vmatmul.mubr.bf16.gmra.mrb[0].mxu0 %v441
        %v611 = vpop.f32.mrb[0].mxu0
        %v612 = vadd.f32 %v367, %v611
        %v613 = vpop.f32.mrb[0].mxu0
        %v614 = vpop.f32.mrb[0].mxu0
        %v615 = vadd.f32 %v367, %v614
        %v616 = vpop.f32.mrb[0].mxu0
        %617 = vmatprep.mubr.bf16.mxu0 0
        %618 = vmatmul.mubr.bf16.gmra.mrb[0].mxu0 %v442
        %v619 = vpop.f32.mrb[0].mxu0
        %v620 = vadd.f32 %v367, %v619
        %v621 = vpop.f32.mrb[0].mxu0
        %v622 = vpop.f32.mrb[0].mxu0
        %v623 = vadd.f32 %v367, %v622
        %v624 = vpop.f32.mrb[0].mxu0
        %625 = vmatprep.mubr.bf16.mxu0 0
        %626 = vmatmul.mubr.bf16.gmra.mrb[0].mxu0 %v443
        %v627 = vpop.f32.mrb[0].mxu0
        %v628 = vadd.f32 %v367, %v627
        %v629 = vpop.f32.mrb[0].mxu0
        %v630 = vpop.f32.mrb[0].mxu0
        %v631 = vadd.f32 %v367, %v630
        %v632 = vpop.f32.mrb[0].mxu0
        %633 = vmatprep.mubr.bf16.mxu0 0
        %634 = vmatmul.mubr.bf16.gmra.mrb[0].mxu0 %v444
        %v635 = vpop.f32.mrb[0].mxu0
        %v636 = vadd.f32 %v367, %v635
        %v637 = vpop.f32.mrb[0].mxu0
        %v638 = vpop.f32.mrb[0].mxu0
        %v639 = vadd.f32 %v367, %v638
        %v640 = vpop.f32.mrb[0].mxu0
        %641 = vmatprep.mubr.bf16.mxu0 0
        %642 = vmatmul.mubr.bf16.gmra.mrb[0].mxu0 %v445
        %v643 = vpop.f32.mrb[0].mxu0
        %v644 = vadd.f32 %v367, %v643
        %v645 = vpop.f32.mrb[0].mxu0
        %v646 = vpop.f32.mrb[0].mxu0
        %v647 = vadd.f32 %v367, %v646
        %v648 = vpop.f32.mrb[0].mxu0
        %649 = vmatprep.mubr.bf16.mxu0 0
        %650 = vmatmul.mubr.bf16.gmra.mrb[0].mxu0 %v446
        %v651 = vpop.f32.mrb[0].mxu0
        %v652 = vadd.f32 %v367, %v651
        %v653 = vpop.f32.mrb[0].mxu0
        %v654 = vpop.f32.mrb[0].mxu0
        %v655 = vadd.f32 %v367, %v654
        %v656 = vpop.f32.mrb[0].mxu0
        %657 = vmatprep.mubr.bf16.mxu0 0
        %658 = vmatmul.mubr.bf16.gmra.mrb[0].mxu0 %v447
        %v659 = vpop.f32.mrb[0].mxu0
        %v660 = vadd.f32 %v367, %v659
        %v661 = vpop.f32.mrb[0].mxu0
        %v662 = vpop.f32.mrb[0].mxu0
        %v663 = vadd.f32 %v367, %v662
        %v664 = vpop.f32.mrb[0].mxu0
        %665 = vmatprep.mubr.bf16.mxu0 0
        %666 = vmatmul.mubr.bf16.gmra.mrb[0].mxu0 %v448
        %v667 = vpop.f32.mrb[0].mxu0
        %v668 = vadd.f32 %v367, %v667
        %v669 = vpop.f32.mrb[0].mxu0
        %v670 = vpop.f32.mrb[0].mxu0
        %v671 = vadd.f32 %v367, %v670
        %v672 = vpop.f32.mrb[0].mxu0
        %673 = vdwg.mxu0
        %v674 = vmax.f32 %v548, 0.0
        %v675 = vmax.f32 %v551, 0.0
        %v676 = vmax.f32 %v556, 0.0
        %v677 = vmax.f32 %v559, 0.0
        %v678 = vmax.f32 %v564, 0.0
        %v679 = vmax.f32 %v567, 0.0
        %v680 = vmax.f32 %v572, 0.0
        %v681 = vmax.f32 %v575, 0.0
        %v682 = vmax.f32 %v580, 0.0
        %v683 = vmax.f32 %v583, 0.0
        %v684 = vmax.f32 %v588, 0.0
        %v685 = vmax.f32 %v591, 0.0
        %v686 = vmax.f32 %v596, 0.0
        %v687 = vmax.f32 %v599, 0.0
        %v688 = vmax.f32 %v604, 0.0
        %v689 = vmax.f32 %v607, 0.0
        %v690 = vmax.f32 %v612, 0.0
        %v691 = vmax.f32 %v615, 0.0
        %v692 = vmax.f32 %v620, 0.0
        %v693 = vmax.f32 %v623, 0.0
        %v694 = vmax.f32 %v628, 0.0
        %v695 = vmax.f32 %v631, 0.0
        %v696 = vmax.f32 %v636, 0.0
        %v697 = vmax.f32 %v639, 0.0
        %v698 = vmax.f32 %v644, 0.0
        %v699 = vmax.f32 %v647, 0.0
        %v700 = vmax.f32 %v652, 0.0
        %v701 = vmax.f32 %v655, 0.0
        %v702 = vmax.f32 %v660, 0.0
        %v703 = vmax.f32 %v663, 0.0
        %v704 = vmax.f32 %v668, 0.0
        %v705 = vmax.f32 %v671, 0.0
        %v706 = vpack.c.bf16 %v675, %v674
        %v707 = vpack.c.bf16 %v677, %v676
        %v708 = vpack.c.bf16 %v679, %v678
        %v709 = vpack.c.bf16 %v681, %v680
        %v710 = vpack.c.bf16 %v683, %v682
        %v711 = vpack.c.bf16 %v685, %v684
        %v712 = vpack.c.bf16 %v687, %v686
        %v713 = vpack.c.bf16 %v689, %v688
        %v714 = vpack.c.bf16 %v691, %v690
        %v715 = vpack.c.bf16 %v693, %v692
        %v716 = vpack.c.bf16 %v695, %v694
        %v717 = vpack.c.bf16 %v697, %v696
        %v718 = vpack.c.bf16 %v699, %v698
        %v719 = vpack.c.bf16 %v701, %v700
        %v720 = vpack.c.bf16 %v703, %v702
        %v721 = vpack.c.bf16 %v705, %v704
        %v722 = vld [vmem:[#allocation7] sm:$0xff]
        %v723 = vld [vmem:[#allocation7 + $0x8] sm:$0xff]
        %v724 = vld [vmem:[#allocation7 + $0x10] sm:$0xff]
        %v725 = vld [vmem:[#allocation7 + $0x18] sm:$0xff]
        %v726 = vld [vmem:[#allocation7 + $0x20] sm:$0xff]
        %v727 = vld [vmem:[#allocation7 + $0x28] sm:$0xff]
        %v728 = vld [vmem:[#allocation7 + $0x30] sm:$0xff]
        %v729 = vld [vmem:[#allocation7 + $0x38] sm:$0xff]
        %v730 = vld [vmem:[#allocation7 + $0x40] sm:$0xff]
        %v731 = vld [vmem:[#allocation7 + $0x48] sm:$0xff]
        %v732 = vld [vmem:[#allocation7 + $0x50] sm:$0xff]
        %v733 = vld [vmem:[#allocation7 + $0x58] sm:$0xff]
        %v734 = vld [vmem:[#allocation7 + $0x60] sm:$0xff]
        %v735 = vld [vmem:[#allocation7 + $0x68] sm:$0xff]
        %v736 = vld [vmem:[#allocation7 + $0x70] sm:$0xff]
        %v737 = vld [vmem:[#allocation7 + $0x78] sm:$0xff]
        %v738 = vld [vmem:[%s4] sm:$0x3]
        %v740 = vlaneseq
        %v741 = vshrl.u32 %v740, 7
        %v742 = vsub.s32 0, %v741
        %v743 = vrot.slane %v738, %v742
        %v744 = vlaneseq
        %v745 = vshrl.u32 %v744, 7
        %v746 = vsub.s32 1, %v745
        %v747 = vrot.slane %v738, %v746
        %v766 = vunpack.c.l.b16 %v722
        %v767 = vunpack.c.h.b16 %v722
        %v768 = vunpack.c.l.b16 %v723
        %v769 = vunpack.c.h.b16 %v723
        %v770 = vunpack.c.l.b16 %v724
        %v771 = vunpack.c.h.b16 %v724
        %v772 = vunpack.c.l.b16 %v725
        %v773 = vunpack.c.h.b16 %v725
        %v774 = vunpack.c.l.b16 %v726
        %v775 = vunpack.c.h.b16 %v726
        %v776 = vunpack.c.l.b16 %v727
        %v777 = vunpack.c.h.b16 %v727
        %v778 = vunpack.c.l.b16 %v728
        %v779 = vunpack.c.h.b16 %v728
        %v780 = vunpack.c.l.b16 %v729
        %v781 = vunpack.c.h.b16 %v729
        %v782 = vunpack.c.l.b16 %v730
        %v783 = vunpack.c.h.b16 %v730
        %v784 = vunpack.c.l.b16 %v731
        %v785 = vunpack.c.h.b16 %v731
        %v786 = vunpack.c.l.b16 %v732
        %v787 = vunpack.c.h.b16 %v732
        %v788 = vunpack.c.l.b16 %v733
        %v789 = vunpack.c.h.b16 %v733
        %v790 = vunpack.c.l.b16 %v734
        %v791 = vunpack.c.h.b16 %v734
        %v792 = vunpack.c.l.b16 %v735
        %v793 = vunpack.c.h.b16 %v735
        %v794 = vunpack.c.l.b16 %v736
        %v795 = vunpack.c.h.b16 %v736
        %v796 = vunpack.c.l.b16 %v737
        %v797 = vunpack.c.h.b16 %v737
        %v798 = vpack.c.b16 %v768, %v766
        %v799 = vpack.c.b16 %v769, %v767
        %v800 = vpack.c.b16 %v772, %v770
        %v801 = vpack.c.b16 %v773, %v771
        %v802 = vpack.c.b16 %v776, %v774
        %v803 = vpack.c.b16 %v777, %v775
        %v804 = vpack.c.b16 %v780, %v778
        %v805 = vpack.c.b16 %v781, %v779
        %v806 = vpack.c.b16 %v784, %v782
        %v807 = vpack.c.b16 %v785, %v783
        %v808 = vpack.c.b16 %v788, %v786
        %v809 = vpack.c.b16 %v789, %v787
        %v810 = vpack.c.b16 %v792, %v790
        %v811 = vpack.c.b16 %v793, %v791
        %v812 = vpack.c.b16 %v796, %v794
        %v813 = vpack.c.b16 %v797, %v795
        %830 = vmatprep.subr.bf16.mxu0 %v799
        %831 = vmatpush1.bf16.msra.mxu0 %v798
        %832 = vmatprep.subr.bf16.mxu0 %v801
        %833 = vmatpush1.bf16.msra.mxu0 %v800
        %834 = vmatprep.subr.bf16.mxu0 %v803
        %835 = vmatpush1.bf16.msra.mxu0 %v802
        %836 = vmatprep.subr.bf16.mxu0 %v805
        %837 = vmatpush1.bf16.msra.mxu0 %v804
        %838 = vmatprep.subr.bf16.mxu0 %v807
        %839 = vmatpush1.bf16.msra.mxu0 %v806
        %840 = vmatprep.subr.bf16.mxu0 %v809
        %841 = vmatpush1.bf16.msra.mxu0 %v808
        %842 = vmatprep.subr.bf16.mxu0 %v811
        %843 = vmatpush1.bf16.msra.mxu0 %v810
        %844 = vmatprep.subr.bf16.mxu0 %v813
        %845 = vmatpush1.bf16.msra.mxu0 %v812
        %846 = vmatprep.subr.bf16.mxu0 0
        %847 = vmatpush1.bf16.msra.mxu0 0
        %848 = vmatprep.subr.bf16.mxu0 0
        %849 = vmatpush1.bf16.msra.mxu0 0
        %850 = vmatprep.subr.bf16.mxu0 0
        %851 = vmatpush1.bf16.msra.mxu0 0
        %852 = vmatprep.subr.bf16.mxu0 0
        %853 = vmatpush1.bf16.msra.mxu0 0
        %854 = vmatprep.subr.bf16.mxu0 0
        %855 = vmatpush1.bf16.msra.mxu0 0
        %856 = vmatprep.subr.bf16.mxu0 0
        %857 = vmatpush1.bf16.msra.mxu0 0
        %858 = vmatprep.subr.bf16.mxu0 0
        %859 = vmatpush1.bf16.msra.mxu0 0
        %860 = vmatprep.subr.bf16.mxu0 0
        %861 = vmatpush1.bf16.msra.mxu0 0
        %862 = vmatprep.mubr.bf16.mxu0 0
        %863 = vmatmul.mubr.bf16.gmra.mrb[0].mxu0 %v706
        %v864 = vpop.f32.mrb[0].mxu0
        %v865 = vadd.f32 %v743, %v864
        %v866 = vpop.f32.mrb[0].mxu0
        %v867 = vadd.f32 %v747, %v866
        %v868 = vpop.f32.mrb[0].mxu0
        %v869 = vadd.f32 %v743, %v868
        %v870 = vpop.f32.mrb[0].mxu0
        %v871 = vadd.f32 %v747, %v870
        %872 = vmatprep.mubr.bf16.mxu0 0
        %873 = vmatmul.mubr.bf16.gmra.mrb[0].mxu0 %v707
        %v874 = vpop.f32.mrb[0].mxu0
        %v875 = vadd.f32 %v743, %v874
        %v876 = vpop.f32.mrb[0].mxu0
        %v877 = vadd.f32 %v747, %v876
        %v878 = vpop.f32.mrb[0].mxu0
        %v879 = vadd.f32 %v743, %v878
        %v880 = vpop.f32.mrb[0].mxu0
        %v881 = vadd.f32 %v747, %v880
        %882 = vmatprep.mubr.bf16.mxu0 0
        %883 = vmatmul.mubr.bf16.gmra.mrb[0].mxu0 %v708
        %v884 = vpop.f32.mrb[0].mxu0
        %v885 = vadd.f32 %v743, %v884
        %v886 = vpop.f32.mrb[0].mxu0
        %v887 = vadd.f32 %v747, %v886
        %v888 = vpop.f32.mrb[0].mxu0
        %v889 = vadd.f32 %v743, %v888
        %v890 = vpop.f32.mrb[0].mxu0
        %v891 = vadd.f32 %v747, %v890
        %892 = vmatprep.mubr.bf16.mxu0 0
        %893 = vmatmul.mubr.bf16.gmra.mrb[0].mxu0 %v709
        %v894 = vpop.f32.mrb[0].mxu0
        %v895 = vadd.f32 %v743, %v894
        %v896 = vpop.f32.mrb[0].mxu0
        %v897 = vadd.f32 %v747, %v896
        %v898 = vpop.f32.mrb[0].mxu0
        %v899 = vadd.f32 %v743, %v898
        %v900 = vpop.f32.mrb[0].mxu0
        %v901 = vadd.f32 %v747, %v900
        %902 = vmatprep.mubr.bf16.mxu0 0
        %903 = vmatmul.mubr.bf16.gmra.mrb[0].mxu0 %v710
        %v904 = vpop.f32.mrb[0].mxu0
        %v905 = vadd.f32 %v743, %v904
        %v906 = vpop.f32.mrb[0].mxu0
        %v907 = vadd.f32 %v747, %v906
        %v908 = vpop.f32.mrb[0].mxu0
        %v909 = vadd.f32 %v743, %v908
        %v910 = vpop.f32.mrb[0].mxu0
        %v911 = vadd.f32 %v747, %v910
        %912 = vmatprep.mubr.bf16.mxu0 0
        %913 = vmatmul.mubr.bf16.gmra.mrb[0].mxu0 %v711
        %v914 = vpop.f32.mrb[0].mxu0
        %v915 = vadd.f32 %v743, %v914
        %v916 = vpop.f32.mrb[0].mxu0
        %v917 = vadd.f32 %v747, %v916
        %v918 = vpop.f32.mrb[0].mxu0
        %v919 = vadd.f32 %v743, %v918
        %v920 = vpop.f32.mrb[0].mxu0
        %v921 = vadd.f32 %v747, %v920
        %922 = vmatprep.mubr.bf16.mxu0 0
        %923 = vmatmul.mubr.bf16.gmra.mrb[0].mxu0 %v712
        %v924 = vpop.f32.mrb[0].mxu0
        %v925 = vadd.f32 %v743, %v924
        %v926 = vpop.f32.mrb[0].mxu0
        %v927 = vadd.f32 %v747, %v926
        %v928 = vpop.f32.mrb[0].mxu0
        %v929 = vadd.f32 %v743, %v928
        %v930 = vpop.f32.mrb[0].mxu0
        %v931 = vadd.f32 %v747, %v930
        %932 = vmatprep.mubr.bf16.mxu0 0
        %933 = vmatmul.mubr.bf16.gmra.mrb[0].mxu0 %v713
        %v934 = vpop.f32.mrb[0].mxu0
        %v935 = vadd.f32 %v743, %v934
        %v936 = vpop.f32.mrb[0].mxu0
        %v937 = vadd.f32 %v747, %v936
        %v938 = vpop.f32.mrb[0].mxu0
        %v939 = vadd.f32 %v743, %v938
        %v940 = vpop.f32.mrb[0].mxu0
        %v941 = vadd.f32 %v747, %v940
        %942 = vmatprep.mubr.bf16.mxu0 0
        %943 = vmatmul.mubr.bf16.gmra.mrb[0].mxu0 %v714
        %v944 = vpop.f32.mrb[0].mxu0
        %v945 = vadd.f32 %v743, %v944
        %v946 = vpop.f32.mrb[0].mxu0
        %v947 = vadd.f32 %v747, %v946
        %v948 = vpop.f32.mrb[0].mxu0
        %v949 = vadd.f32 %v743, %v948
        %v950 = vpop.f32.mrb[0].mxu0
        %v951 = vadd.f32 %v747, %v950
        %952 = vmatprep.mubr.bf16.mxu0 0
        %953 = vmatmul.mubr.bf16.gmra.mrb[0].mxu0 %v715
        %v954 = vpop.f32.mrb[0].mxu0
        %v955 = vadd.f32 %v743, %v954
        %v956 = vpop.f32.mrb[0].mxu0
        %v957 = vadd.f32 %v747, %v956
        %v958 = vpop.f32.mrb[0].mxu0
        %v959 = vadd.f32 %v743, %v958
        %v960 = vpop.f32.mrb[0].mxu0
        %v961 = vadd.f32 %v747, %v960
        %962 = vmatprep.mubr.bf16.mxu0 0
        %963 = vmatmul.mubr.bf16.gmra.mrb[0].mxu0 %v716
        %v964 = vpop.f32.mrb[0].mxu0
        %v965 = vadd.f32 %v743, %v964
        %v966 = vpop.f32.mrb[0].mxu0
        %v967 = vadd.f32 %v747, %v966
        %v968 = vpop.f32.mrb[0].mxu0
        %v969 = vadd.f32 %v743, %v968
        %v970 = vpop.f32.mrb[0].mxu0
        %v971 = vadd.f32 %v747, %v970
        %972 = vmatprep.mubr.bf16.mxu0 0
        %973 = vmatmul.mubr.bf16.gmra.mrb[0].mxu0 %v717
        %v974 = vpop.f32.mrb[0].mxu0
        %v975 = vadd.f32 %v743, %v974
        %v976 = vpop.f32.mrb[0].mxu0
        %v977 = vadd.f32 %v747, %v976
        %v978 = vpop.f32.mrb[0].mxu0
        %v979 = vadd.f32 %v743, %v978
        %v980 = vpop.f32.mrb[0].mxu0
        %v981 = vadd.f32 %v747, %v980
        %982 = vmatprep.mubr.bf16.mxu0 0
        %983 = vmatmul.mubr.bf16.gmra.mrb[0].mxu0 %v718
        %v984 = vpop.f32.mrb[0].mxu0
        %v985 = vadd.f32 %v743, %v984
        %v986 = vpop.f32.mrb[0].mxu0
        %v987 = vadd.f32 %v747, %v986
        %v988 = vpop.f32.mrb[0].mxu0
        %v989 = vadd.f32 %v743, %v988
        %v990 = vpop.f32.mrb[0].mxu0
        %v991 = vadd.f32 %v747, %v990
        %992 = vmatprep.mubr.bf16.mxu0 0
        %993 = vmatmul.mubr.bf16.gmra.mrb[0].mxu0 %v719
        %v994 = vpop.f32.mrb[0].mxu0
        %v995 = vadd.f32 %v743, %v994
        %v996 = vpop.f32.mrb[0].mxu0
        %v997 = vadd.f32 %v747, %v996
        %v998 = vpop.f32.mrb[0].mxu0
        %v999 = vadd.f32 %v743, %v998
        %v1000 = vpop.f32.mrb[0].mxu0
        %v1001 = vadd.f32 %v747, %v1000
        %1002 = vmatprep.mubr.bf16.mxu0 0
        %1003 = vmatmul.mubr.bf16.gmra.mrb[0].mxu0 %v720
        %v1004 = vpop.f32.mrb[0].mxu0
        %v1005 = vadd.f32 %v743, %v1004
        %v1006 = vpop.f32.mrb[0].mxu0
        %v1007 = vadd.f32 %v747, %v1006
        %v1008 = vpop.f32.mrb[0].mxu0
        %v1009 = vadd.f32 %v743, %v1008
        %v1010 = vpop.f32.mrb[0].mxu0
        %v1011 = vadd.f32 %v747, %v1010
        %1012 = vmatprep.mubr.bf16.mxu0 0
        %1013 = vmatmul.mubr.bf16.gmra.mrb[0].mxu0 %v721
        %v1014 = vpop.f32.mrb[0].mxu0
        %v1015 = vadd.f32 %v743, %v1014
        %v1016 = vpop.f32.mrb[0].mxu0
        %v1017 = vadd.f32 %v747, %v1016
        %v1018 = vpop.f32.mrb[0].mxu0
        %v1019 = vadd.f32 %v743, %v1018
        %v1020 = vpop.f32.mrb[0].mxu0
        %v1021 = vadd.f32 %v747, %v1020
        %1022 = vdwg.mxu0
        %1023 = vst [vmem:[%s302] sm:$0xff] %v865
        %1024 = vst [vmem:[%s302 + $0x8] sm:$0xff] %v869
        %1025 = vst [vmem:[%s302 + $0x10] sm:$0xff] %v875
        %1026 = vst [vmem:[%s302 + $0x18] sm:$0xff] %v879
        %1027 = vst [vmem:[%s302 + $0x20] sm:$0xff] %v885
        %1028 = vst [vmem:[%s302 + $0x28] sm:$0xff] %v889
        %1029 = vst [vmem:[%s302 + $0x30] sm:$0xff] %v895
        %1030 = vst [vmem:[%s302 + $0x38] sm:$0xff] %v899
        %1031 = vst [vmem:[%s302 + $0x40] sm:$0xff] %v905
        %1032 = vst [vmem:[%s302 + $0x48] sm:$0xff] %v909
        %1033 = vst [vmem:[%s302 + $0x50] sm:$0xff] %v915
        %1034 = vst [vmem:[%s302 + $0x58] sm:$0xff] %v919
        %1035 = vst [vmem:[%s302 + $0x60] sm:$0xff] %v925
        %1036 = vst [vmem:[%s302 + $0x68] sm:$0xff] %v929
        %1037 = vst [vmem:[%s302 + $0x70] sm:$0xff] %v935
        %1038 = vst [vmem:[%s302 + $0x78] sm:$0xff] %v939
        %1039 = vst [vmem:[%s302 + $0x80] sm:$0xff] %v945
        %1040 = vst [vmem:[%s302 + $0x88] sm:$0xff] %v949
        %1041 = vst [vmem:[%s302 + $0x90] sm:$0xff] %v955
        %1042 = vst [vmem:[%s302 + $0x98] sm:$0xff] %v959
        %1043 = vst [vmem:[%s302 + $0xa0] sm:$0xff] %v965
        %1044 = vst [vmem:[%s302 + $0xa8] sm:$0xff] %v969
        %1045 = vst [vmem:[%s302 + $0xb0] sm:$0xff] %v975
        %1046 = vst [vmem:[%s302 + $0xb8] sm:$0xff] %v979
        %1047 = vst [vmem:[%s302 + $0xc0] sm:$0xff] %v985
        %1048 = vst [vmem:[%s302 + $0xc8] sm:$0xff] %v989
        %1049 = vst [vmem:[%s302 + $0xd0] sm:$0xff] %v995
        %1050 = vst [vmem:[%s302 + $0xd8] sm:$0xff] %v999
        %1051 = vst [vmem:[%s302 + $0xe0] sm:$0xff] %v1005
        %1052 = vst [vmem:[%s302 + $0xe8] sm:$0xff] %v1009
        %1053 = vst [vmem:[%s302 + $0xf0] sm:$0xff] %v1015
        %1054 = vst [vmem:[%s302 + $0xf8] sm:$0xff] %v1019
        %1055 = vst [vmem:[%s309] sm:$0xff] %v867
        %1056 = vst [vmem:[%s309 + $0x8] sm:$0xff] %v871
        %1057 = vst [vmem:[%s309 + $0x10] sm:$0xff] %v877
        %1058 = vst [vmem:[%s309 + $0x18] sm:$0xff] %v881
        %1059 = vst [vmem:[%s309 + $0x20] sm:$0xff] %v887
        %1060 = vst [vmem:[%s309 + $0x28] sm:$0xff] %v891
        %1061 = vst [vmem:[%s309 + $0x30] sm:$0xff] %v897
        %1062 = vst [vmem:[%s309 + $0x38] sm:$0xff] %v901
        %1063 = vst [vmem:[%s309 + $0x40] sm:$0xff] %v907
        %1064 = vst [vmem:[%s309 + $0x48] sm:$0xff] %v911
        %1065 = vst [vmem:[%s309 + $0x50] sm:$0xff] %v917
        %1066 = vst [vmem:[%s309 + $0x58] sm:$0xff] %v921
        %1067 = vst [vmem:[%s309 + $0x60] sm:$0xff] %v927
        %1068 = vst [vmem:[%s309 + $0x68] sm:$0xff] %v931
        %1069 = vst [vmem:[%s309 + $0x70] sm:$0xff] %v937
        %1070 = vst [vmem:[%s309 + $0x78] sm:$0xff] %v941
        %1071 = vst [vmem:[%s309 + $0x80] sm:$0xff] %v947
        %1072 = vst [vmem:[%s309 + $0x88] sm:$0xff] %v951
        %1073 = vst [vmem:[%s309 + $0x90] sm:$0xff] %v957
        %1074 = vst [vmem:[%s309 + $0x98] sm:$0xff] %v961
        %1075 = vst [vmem:[%s309 + $0xa0] sm:$0xff] %v967
        %1076 = vst [vmem:[%s309 + $0xa8] sm:$0xff] %v971
        %1077 = vst [vmem:[%s309 + $0xb0] sm:$0xff] %v977
        %1078 = vst [vmem:[%s309 + $0xb8] sm:$0xff] %v981
        %1079 = vst [vmem:[%s309 + $0xc0] sm:$0xff] %v987
        %1080 = vst [vmem:[%s309 + $0xc8] sm:$0xff] %v991
        %1081 = vst [vmem:[%s309 + $0xd0] sm:$0xff] %v997
        %1082 = vst [vmem:[%s309 + $0xd8] sm:$0xff] %v1001
        %1083 = vst [vmem:[%s309 + $0xe0] sm:$0xff] %v1007
        %1084 = vst [vmem:[%s309 + $0xe8] sm:$0xff] %v1011
        %1085 = vst [vmem:[%s309 + $0xf0] sm:$0xff] %v1017
        %1086 = vst [vmem:[%s309 + $0xf8] sm:$0xff] %v1021
        %s1087 = sand.u32 %s146, 1
        %s1088 = scalar_lea.sflag [#allocation4], %s1087
        %s1089 = sand.u32 %s146, 1
        %s1090 = smul.addr %s1089, 256
        %s1091 = scalar_lea.vmem [#allocation8], %s1090
        %s1092 = sand.u32 %s172, 1
        %s1093 = scalar_lea.sflag [#allocation10], %s1092
        %s1094 = sand.u32 %s172, 1
        %s1095 = smul.addr %s1094, 256
        %s1096 = scalar_lea.vmem [#allocation9], %s1095
        // Predicated region
        $region53: #{tpu_custom_call.1} parent=39 // pred_check
          %p1097 = pneg %p156
        $region54: #{tpu_custom_call.1} parent=39 // pred_check_branch
          %1099 = sbr.rel (%p1097) target = $region56
        $region55: #{tpu_custom_call.1} parent=39 // pred_region
          %s1100 = smul.u32 32, %s28
          %s1102 = ssub.s32 4096, 4096
          %1103 = vsyncadd %s1088, %s1102
          %s1104 = smul.addr %s1100, 128
          %s1105 = scalar_lea.hbm %s5, %s1104
          %s1106 = sshll.u32 %s1091, 4
          %s1107 = int_to_ptr.vmem [resolvable:$true] %s1106
          %1112 = dma.vmem_to_hbm [thread:$0]  %s1107, 4096, %s1105, %s1088, 128, 128, 8
        $region56: #{tpu_custom_call.1} parent=39 // pred_fallthru
          _
        // Predicated region
        $region57: #{tpu_custom_call.1} parent=39 // pred_check
          %p1113 = pneg %p182
        $region58: #{tpu_custom_call.1} parent=39 // pred_check_branch
          %1115 = sbr.rel (%p1113) target = $region60
        $region59: #{tpu_custom_call.1} parent=39 // pred_region
          %s1116 = smul.u32 32, %s28
          %s1118 = ssub.s32 4096, 4096
          %1119 = vsyncadd %s1093, %s1118
          %s1120 = smul.addr %s1116, 128
          %s1121 = scalar_lea.hbm %s6, %s1120
          %s1122 = sshll.u32 %s1096, 4
          %s1123 = int_to_ptr.vmem [resolvable:$true] %s1122
          %1128 = dma.vmem_to_hbm [thread:$0]  %s1123, 4096, %s1121, %s1093, 128, 128, 8
        $region60: #{tpu_custom_call.1} parent=39 // pred_fallthru
          _
      $region40: #{tpu_custom_call.1} parent=5 // pred_fallthru
        _
      %p1129 = scmp.le.s32.totalorder 2, %s23
      // Predicated region
      $region61: #{tpu_custom_call.1} parent=5 // pred_check
        %p1130 = pneg %p1129
      $region62: #{tpu_custom_call.1} parent=5 // pred_check_branch
        %1132 = sbr.rel (%p1130) target = $region64
      $region63: #{tpu_custom_call.1} parent=5 // pred_region
        %s1133 = ssub.s32 %s23, 2
        // Predicated region
        $region65: #{tpu_custom_call.1} parent=63 // pred_check
          %p1134 = pneg %p162
        $region66: #{tpu_custom_call.1} parent=63 // pred_check_branch
          %1136 = sbr.rel (%p1134) target = $region68
        $region67: #{tpu_custom_call.1} parent=63 // pred_region
          %s1137 = sand.u32 %s147, 1
          %s1138 = scalar_lea.sflag [#allocation4], %s1137
          %s1139 = sand.u32 %s147, 1
          %s1140 = smul.addr %s1139, 256
          %s1141 = scalar_lea.vmem [#allocation8], %s1140
          %1142 = dma.done %s1138, 4096
        $region68: #{tpu_custom_call.1} parent=63 // pred_fallthru
          _
        // Predicated region
        $region69: #{tpu_custom_call.1} parent=63 // pred_check
          %p1143 = pneg %p188
        $region70: #{tpu_custom_call.1} parent=63 // pred_check_branch
          %1145 = sbr.rel (%p1143) target = $region72
        $region71: #{tpu_custom_call.1} parent=63 // pred_region
          %s1146 = sand.u32 %s173, 1
          %s1147 = scalar_lea.sflag [#allocation10], %s1146
          %s1148 = sand.u32 %s173, 1
          %s1149 = smul.addr %s1148, 256
          %s1150 = scalar_lea.vmem [#allocation9], %s1149
          %1151 = dma.done %s1147, 4096
        $region72: #{tpu_custom_call.1} parent=63 // pred_fallthru
          _
      $region64: #{tpu_custom_call.1} parent=5 // pred_fallthru
        _
    $region6: #{tpu_custom_call.1} parent=1 // loop_footer
      %s27 = sadd.s32 1, %s23
    $region7: #{tpu_custom_call.1} parent=1 // loop_footer_branch
      %22 = sbr.rel target = $region3
    $region8: #{tpu_custom_call.1} parent=1 // loop_exit
      _
    %1152 = vsyncpa [#allocation3], 1
    %s1153 = scalar_lea.sflag [#allocation3], 1
    %1154 = vsyncpa %s1153, 1
    %1155 = vsyncpa [#allocation6], 1
    %1156 = vsyncpa [#allocation4], 1
    %s1157 = scalar_lea.sflag [#allocation4], 1
    %1158 = vsyncpa %s1157, 1
    %1159 = vsyncpa [#allocation10], 1
    %s1160 = scalar_lea.sflag [#allocation10], 1
    %1161 = vsyncpa %s1160, 1

// kernel: tpu_custom_call.1
$region0: #{tpu_custom_call.1}
  #allocation0 [shape = 'u32[]', space=smem, size = 0x4, offset = 0x4, fixed_abs, tag = 'smem constant byte address 0x4 - core index']
  #allocation1 [shape = 'u32[144,128]{1,0:T(1,128)}', space=vmem, size = 0x12000, scoped, tag = 'internal scratch']
  %s0 = inlined_call_operand.hbm [shape: bf16[512,128], index: 0, kind: input, shape index: {}]
  %s1 = inlined_call_operand.hbm [shape: bf16[128,128], index: 1, kind: input, shape index: {}]
  %s2 = inlined_call_operand.vmem [shape: f32[1,128], index: 2, kind: input, shape index: {}]
  %s3 = inlined_call_operand.hbm [shape: bf16[128,256], index: 3, kind: input, shape index: {}]
  %s4 = inlined_call_operand.vmem [shape: f32[1,256], index: 4, kind: input, shape index: {}]
  %s5 = inlined_call_operand.hbm [shape: f32[512,128], index: 5, kind: output, shape index: {0}]
  %s6 = inlined_call_operand.hbm [shape: f32[512,128], index: 6, kind: output, shape index: {1}]
  %7 = xla_tuple %s5, %s6
  %s8 = sld [smem:[#allocation0]]
  $region73: #{tpu_custom_call.1} parent=0
    _
  %s10 = ssub.s32 1, %s8
  %s11 = scalar_select 0, %s10, %s8
  $region1: #{tpu_custom_call.1} parent=0
    #allocation2 [shape = 'u8[131072]{0}', space=vmem, size = 0x20000, scoped, tag = 'input window, operand 0']
    #allocation3 [shape = 's32[2]{0}', space=sflag, size = 0x8, scoped, tag = 'scoped memory for tpu_custom_call.1']
    #allocation4 [shape = 's32[2]{0}', space=sflag, size = 0x8, scoped, tag = 'scoped memory for tpu_custom_call.1']
    #allocation5 [shape = 'u8[32768]{0}', space=vmem, size = 0x8000, scoped, tag = 'input window, operand 1, single buffered']
    #allocation6 [shape = 's32[1]{0}', space=sflag, size = 0x4, scoped, tag = 'scoped memory for tpu_custom_call.1']
    #allocation7 [shape = 'u8[65536]{0}', space=vmem, size = 0x10000, scoped, tag = 'input window, operand 3, single buffered']
    #allocation8 [shape = 'u8[262144]{0}', space=vmem, size = 0x40000, scoped, tag = 'output window, operand 0']
    #allocation9 [shape = 'u8[262144]{0}', space=vmem, size = 0x40000, scoped, tag = 'output window, operand 1']
    #allocation10 [shape = 's32[2]{0}', space=sflag, size = 0x8, scoped, tag = 'scoped memory for tpu_custom_call.1']
    %12 = vsyncpa [#allocation3], 0
    %s13 = scalar_lea.sflag [#allocation3], 1
    %14 = vsyncpa %s13, 0
    %15 = vsyncpa [#allocation6], 0
    %16 = vsyncpa [#allocation4], 0
    %s17 = scalar_lea.sflag [#allocation4], 1
    %18 = vsyncpa %s17, 0
    %19 = vsyncpa [#allocation10], 0
    %s20 = scalar_lea.sflag [#allocation10], 1
    %21 = vsyncpa %s20, 0
    loop: start=0, step=1, limit=4
    $region2: #{tpu_custom_call.1} parent=1 // loop_pre_header
      _
    $region3: #{tpu_custom_call.1} parent=1 // loop_header
      %s23 = sphi 0, %s27
      %p24 = scmp.ge.s32.totalorder %s23, 4
      %s33 = sphi 0, %s35
      %s36 = sphi 0, %s33
      %s37 = sphi 0, %s36
      %s53 = sphi 0, %s37
      %s57 = sphi 0, %s57
      %s59 = sphi 0, %s57
      %s60 = sphi 0, %s59
      %s74 = sphi 0, %s60
      %s78 = sphi 0, %s78
      %s80 = sphi 0, %s78
      %s81 = sphi 0, %s80
      %s95 = sphi 0, %s81
      %s99 = sphi 0, %s99
      %s101 = sphi 0, %s99
      %s102 = sphi 0, %s101
      %s116 = sphi 0, %s102
      %s120 = sphi 0, %s120
      %s122 = sphi 0, %s120
      %s123 = sphi 0, %s122
      %s137 = sphi 0, %s123
      %s143 = sphi 0, %s145
      %s146 = sphi 0, %s143
      %s147 = sphi 0, %s146
      %s163 = sphi 0, %s147
      %s169 = sphi 0, %s171
      %s172 = sphi 0, %s169
      %s173 = sphi 0, %s172
      %s189 = sphi 0, %s173
    $region4: #{tpu_custom_call.1} parent=1 // loop_header_branch
      %26 = sbr.rel (%p24) target = $region8
    $region5: #{tpu_custom_call.1} parent=1 // loop_body
      %s28 = ssub.s32 %s23, 1
      %s29 = ssub.s32 %s23, 2
      %s30 = sadd.s32 %s23, 1
      %s31 = ssub.s32 %s23, %s30
      %p32 = scmp.eq.s32.totalorder %s31, 0
      %s34 = sadd.s32 %s33, 1
      %s35 = scalar_select %p32, %s33, %s34
      %p38 = pneg %p32
      %p39 = scmp.eq.s32.totalorder %s23, 1
      %p40 = por %p38, %p39
      %p41 = scmp.ne.s32.totalorder %s33, %s36
      %p42 = scmp.eq.s32.totalorder %s23, 0
      %p43 = por %p41, %p42
      %p44 = scmp.ne.s32.totalorder %s33, %s36
      %p45 = scmp.eq.s32.totalorder %s28, 1
      %p46 = por %p44, %p45
      %p47 = scmp.ne.s32.totalorder %s36, %s37
      %p48 = scmp.eq.s32.totalorder %s28, 0
      %p49 = por %p47, %p48
      %p50 = scmp.ne.s32.totalorder %s36, %s37
      %p51 = scmp.eq.s32.totalorder %s29, 1
      %p52 = por %p50, %p51
      %p54 = scmp.ne.s32.totalorder %s37, %s53
      %p55 = scmp.eq.s32.totalorder %s29, 0
      %p56 = por %p54, %p55
      %s58 = sadd.s32 %s57, 1
      %p61 = scmp.eq.s32.totalorder %s23, 1
      %p62 = scmp.ne.s32.totalorder %s57, %s59
      %p63 = scmp.eq.s32.totalorder %s23, 0
      %p64 = por %p62, %p63
      %p65 = scmp.ne.s32.totalorder %s57, %s59
      %p66 = scmp.eq.s32.totalorder %s28, 1
      %p67 = por %p65, %p66
      %p68 = scmp.ne.s32.totalorder %s59, %s60
      %p69 = scmp.eq.s32.totalorder %s28, 0
      %p70 = por %p68, %p69
      %p71 = scmp.ne.s32.totalorder %s59, %s60
      %p72 = scmp.eq.s32.totalorder %s29, 1
      %p73 = por %p71, %p72
      %p75 = scmp.ne.s32.totalorder %s60, %s74
      %p76 = scmp.eq.s32.totalorder %s29, 0
      %p77 = por %p75, %p76
      %s79 = sadd.s32 %s78, 1
      %p82 = scmp.eq.s32.totalorder %s23, 1
      %p83 = scmp.ne.s32.totalorder %s78, %s80
      %p84 = scmp.eq.s32.totalorder %s23, 0
      %p85 = por %p83, %p84
      %p86 = scmp.ne.s32.totalorder %s78, %s80
      %p87 = scmp.eq.s32.totalorder %s28, 1
      %p88 = por %p86, %p87
      %p89 = scmp.ne.s32.totalorder %s80, %s81
      %p90 = scmp.eq.s32.totalorder %s28, 0
      %p91 = por %p89, %p90
      %p92 = scmp.ne.s32.totalorder %s80, %s81
      %p93 = scmp.eq.s32.totalorder %s29, 1
      %p94 = por %p92, %p93
      %p96 = scmp.ne.s32.totalorder %s81, %s95
      %p97 = scmp.eq.s32.totalorder %s29, 0
      %p98 = por %p96, %p97
      %s100 = sadd.s32 %s99, 1
      %p103 = scmp.eq.s32.totalorder %s23, 1
      %p104 = scmp.ne.s32.totalorder %s99, %s101
      %p105 = scmp.eq.s32.totalorder %s23, 0
      %p106 = por %p104, %p105
      %p107 = scmp.ne.s32.totalorder %s99, %s101
      %p108 = scmp.eq.s32.totalorder %s28, 1
      %p109 = por %p107, %p108
      %p110 = scmp.ne.s32.totalorder %s101, %s102
      %p111 = scmp.eq.s32.totalorder %s28, 0
      %p112 = por %p110, %p111
      %p113 = scmp.ne.s32.totalorder %s101, %s102
      %p114 = scmp.eq.s32.totalorder %s29, 1
      %p115 = por %p113, %p114
      %p117 = scmp.ne.s32.totalorder %s102, %s116
      %p118 = scmp.eq.s32.totalorder %s29, 0
      %p119 = por %p117, %p118
      %s121 = sadd.s32 %s120, 1
      %p124 = scmp.eq.s32.totalorder %s23, 1
      %p125 = scmp.ne.s32.totalorder %s120, %s122
      %p126 = scmp.eq.s32.totalorder %s23, 0
      %p127 = por %p125, %p126
      %p128 = scmp.ne.s32.totalorder %s120, %s122
      %p129 = scmp.eq.s32.totalorder %s28, 1
      %p130 = por %p128, %p129
      %p131 = scmp.ne.s32.totalorder %s122, %s123
      %p132 = scmp.eq.s32.totalorder %s28, 0
      %p133 = por %p131, %p132
      %p134 = scmp.ne.s32.totalorder %s122, %s123
      %p135 = scmp.eq.s32.totalorder %s29, 1
      %p136 = por %p134, %p135
      %p138 = scmp.ne.s32.totalorder %s123, %s137
      %p139 = scmp.eq.s32.totalorder %s29, 0
      %p140 = por %p138, %p139
      %s141 = ssub.s32 %s23, %s30
      %p142 = scmp.eq.s32.totalorder %s141, 0
      %s144 = sadd.s32 %s143, 1
      %s145 = scalar_select %p142, %s143, %s144
      %p148 = pneg %p142
      %p149 = scmp.eq.s32.totalorder %s23, 1
      %p150 = por %p148, %p149
      %p151 = scmp.ne.s32.totalorder %s143, %s146
      %p152 = scmp.eq.s32.totalorder %s23, 0
      %p153 = por %p151, %p152
      %p154 = scmp.ne.s32.totalorder %s143, %s146
      %p155 = scmp.eq.s32.totalorder %s28, 1
      %p156 = por %p154, %p155
      %p157 = scmp.ne.s32.totalorder %s146, %s147
      %p158 = scmp.eq.s32.totalorder %s28, 0
      %p159 = por %p157, %p158
      %p160 = scmp.ne.s32.totalorder %s146, %s147
      %p161 = scmp.eq.s32.totalorder %s29, 1
      %p162 = por %p160, %p161
      %p164 = scmp.ne.s32.totalorder %s147, %s163
      %p165 = scmp.eq.s32.totalorder %s29, 0
      %p166 = por %p164, %p165
      %s167 = ssub.s32 %s23, %s30
      %p168 = scmp.eq.s32.totalorder %s167, 0
      %s170 = sadd.s32 %s169, 1
      %s171 = scalar_select %p168, %s169, %s170
      %p174 = pneg %p168
      %p175 = scmp.eq.s32.totalorder %s23, 1
      %p176 = por %p174, %p175
      %p177 = scmp.ne.s32.totalorder %s169, %s172
      %p178 = scmp.eq.s32.totalorder %s23, 0
      %p179 = por %p177, %p178
      %p180 = scmp.ne.s32.totalorder %s169, %s172
      %p181 = scmp.eq.s32.totalorder %s28, 1
      %p182 = por %p180, %p181
      %p183 = scmp.ne.s32.totalorder %s172, %s173
      %p184 = scmp.eq.s32.totalorder %s28, 0
      %p185 = por %p183, %p184
      %p186 = scmp.ne.s32.totalorder %s172, %s173
      %p187 = scmp.eq.s32.totalorder %s29, 1
      %p188 = por %p186, %p187
      %p190 = scmp.ne.s32.totalorder %s173, %s189
      %p191 = scmp.eq.s32.totalorder %s29, 0
      %p192 = por %p190, %p191
      %p193 = scmp.le.s32.totalorder 1, %s23
      %p194 = scmp.lt.s32.totalorder %s23, 3
      %p195 = pnand %p193, %p194
      %p196 = pneg %p195
      // Predicated region
      $region9: #{tpu_custom_call.1} parent=5 // pred_check
        _
      $region10: #{tpu_custom_call.1} parent=5 // pred_check_branch
        %198 = sbr.rel (%p195) target = $region12
      $region11: #{tpu_custom_call.1} parent=5 // pred_region
        %s199 = ssub.s32 %s23, 1
        // Predicated region
        $region13: #{tpu_custom_call.1} parent=11 // pred_check
          %p200 = pneg %p70
        $region14: #{tpu_custom_call.1} parent=11 // pred_check_branch
          %202 = sbr.rel (%p200) target = $region16
        $region15: #{tpu_custom_call.1} parent=11 // pred_region
          %s204 = ssub.s32 1024, 1024
          %205 = vsyncadd [#allocation6], %s204
          %s206 = sshll.u32 [#allocation5], 4
          %s207 = int_to_ptr.vmem [resolvable:$true] %s206
          %212 = dma.hbm_to_vmem [thread:$0]  %s1, 1024, %s207, [#allocation6], 64, 64, 4
        $region16: #{tpu_custom_call.1} parent=11 // pred_fallthru
          _
        // Predicated region
        $region17: #{tpu_custom_call.1} parent=11 // pred_check
          %p213 = pneg %p91
        $region18: #{tpu_custom_call.1} parent=11 // pred_check_branch
          %215 = sbr.rel (%p213) target = $region20
        $region19: #{tpu_custom_call.1} parent=11 // pred_region
          _
        $region20: #{tpu_custom_call.1} parent=11 // pred_fallthru
          _
        // Predicated region
        $region21: #{tpu_custom_call.1} parent=11 // pred_check
          %p216 = pneg %p112
        $region22: #{tpu_custom_call.1} parent=11 // pred_check_branch
          %218 = sbr.rel (%p216) target = $region24
        $region23: #{tpu_custom_call.1} parent=11 // pred_region
          %s220 = ssub.s32 2048, 2048
          %221 = vsyncadd [#allocation6], %s220
          %s222 = sshll.u32 [#allocation7], 4
          %s223 = int_to_ptr.vmem [resolvable:$true] %s222
          %228 = dma.hbm_to_vmem [thread:$0]  %s3, 2048, %s223, [#allocation6], 128, 128, 8
        $region24: #{tpu_custom_call.1} parent=11 // pred_fallthru
          _
        // Predicated region
        $region25: #{tpu_custom_call.1} parent=11 // pred_check
          %p229 = pneg %p133
        $region26: #{tpu_custom_call.1} parent=11 // pred_check_branch
          %231 = sbr.rel (%p229) target = $region28
        $region27: #{tpu_custom_call.1} parent=11 // pred_region
          _
        $region28: #{tpu_custom_call.1} parent=11 // pred_fallthru
          _
      $region12: #{tpu_custom_call.1} parent=5 // pred_fallthru
        _
      %p232 = scmp.lt.s32.totalorder %s23, 2
      // Predicated region
      $region29: #{tpu_custom_call.1} parent=5 // pred_check
        %p233 = pneg %p232
      $region30: #{tpu_custom_call.1} parent=5 // pred_check_branch
        %235 = sbr.rel (%p233) target = $region32
      $region31: #{tpu_custom_call.1} parent=5 // pred_region
        // Predicated region
        $region33: #{tpu_custom_call.1} parent=31 // pred_check
          %p236 = pneg %p43
        $region34: #{tpu_custom_call.1} parent=31 // pred_check_branch
          %238 = sbr.rel (%p236) target = $region36
        $region35: #{tpu_custom_call.1} parent=31 // pred_region
          %s239 = sand.u32 %s33, 1
          %s240 = scalar_lea.sflag [#allocation3], %s239
          %s241 = sand.u32 %s33, 1
          %s242 = smul.addr %s241, 128
          %s243 = scalar_lea.vmem [#allocation2], %s242
          %s244 = smul.u32 32, %s23
          %s246 = ssub.s32 2048, 2048
          %247 = vsyncadd %s240, %s246
          %s248 = smul.addr %s244, 64
          %s249 = scalar_lea.hbm %s0, %s248
          %s250 = sshll.u32 %s243, 4
          %s251 = int_to_ptr.vmem [resolvable:$true] %s250
          %256 = dma.hbm_to_vmem [thread:$0]  %s249, 2048, %s251, %s240, 64, 64, 4
        $region36: #{tpu_custom_call.1} parent=31 // pred_fallthru
          _
      $region32: #{tpu_custom_call.1} parent=5 // pred_fallthru
        _
      %p257 = scmp.le.s32.totalorder 1, %s23
      %p258 = scmp.lt.s32.totalorder %s23, 3
      %p259 = pnand %p257, %p258
      %p260 = pneg %p259
      // Predicated region
      $region37: #{tpu_custom_call.1} parent=5 // pred_check
        _
      $region38: #{tpu_custom_call.1} parent=5 // pred_check_branch
        %262 = sbr.rel (%p259) target = $region40
      $region39: #{tpu_custom_call.1} parent=5 // pred_region
        %s263 = ssub.s32 %s23, 1
        %s264 = sand.u32 %s36, 1
        %s265 = scalar_lea.sflag [#allocation3], %s264
        %s266 = sand.u32 %s36, 1
        %s267 = smul.addr %s266, 128
        %s268 = scalar_lea.vmem [#allocation2], %s267
        // Predicated region
        $region41: #{tpu_custom_call.1} parent=39 // pred_check
          %p269 = pneg %p49
        $region42: #{tpu_custom_call.1} parent=39 // pred_check_branch
          %271 = sbr.rel (%p269) target = $region44
        $region43: #{tpu_custom_call.1} parent=39 // pred_region
          %272 = dma.done %s265, 2048
        $region44: #{tpu_custom_call.1} parent=39 // pred_fallthru
          _
        // Predicated region
        $region45: #{tpu_custom_call.1} parent=39 // pred_check
          %p273 = pneg %p70
        $region46: #{tpu_custom_call.1} parent=39 // pred_check_branch
          %275 = sbr.rel (%p273) target = $region48
        $region47: #{tpu_custom_call.1} parent=39 // pred_region
          %276 = dma.done [#allocation6], 1024
        $region48: #{tpu_custom_call.1} parent=39 // pred_fallthru
          _
        // Predicated region
        $region49: #{tpu_custom_call.1} parent=39 // pred_check
          %p277 = pneg %p112
        $region50: #{tpu_custom_call.1} parent=39 // pred_check_branch
          %279 = sbr.rel (%p277) target = $region52
        $region51: #{tpu_custom_call.1} parent=39 // pred_region
          %280 = dma.done [#allocation6], 2048
        $region52: #{tpu_custom_call.1} parent=39 // pred_fallthru
          _
        %s281 = sand.u32 %s36, 1
        %s282 = scalar_lea.sflag [#allocation3], %s281
        %s283 = sand.u32 %s36, 1
        %s284 = smul.addr %s283, 128
        %s285 = scalar_lea.vmem [#allocation2], %s284
        %p286 = pneg %p49
        %p287 = pneg %p46
        %p288 = pneg %p70
        %p289 = pneg %p67
        %p290 = pneg %p91
        %p291 = pneg %p88
        %p292 = pneg %p112
        %p293 = pneg %p109
        %p294 = pneg %p133
        %p295 = pneg %p130
        %p296 = pneg %p159
        %p297 = pneg %p156
        %s298 = sand.u32 %s146, 1
        %s299 = scalar_lea.sflag [#allocation4], %s298
        %s300 = sand.u32 %s146, 1
        %s301 = smul.addr %s300, 256
        %s302 = scalar_lea.vmem [#allocation8], %s301
        %p303 = pneg %p185
        %p304 = pneg %p182
        %s305 = sand.u32 %s172, 1
        %s306 = scalar_lea.sflag [#allocation10], %s305
        %s307 = sand.u32 %s172, 1
        %s308 = smul.addr %s307, 256
        %s309 = scalar_lea.vmem [#allocation9], %s308
        %s310 = smul.u32 32, %s28
        %s311 = smul.u32 32, %s28
        %s312 = smul.u32 32, %s28
        %v314 = vld [vmem:[%s268] sm:$0xf]
        %v315 = vld [vmem:[%s268 + $0x4] sm:$0xf]
        %v316 = vld [vmem:[%s268 + $0x8] sm:$0xf]
        %v317 = vld [vmem:[%s268 + $0xc] sm:$0xf]
        %v318 = vld [vmem:[%s268 + $0x10] sm:$0xf]
        %v319 = vld [vmem:[%s268 + $0x14] sm:$0xf]
        %v320 = vld [vmem:[%s268 + $0x18] sm:$0xf]
        %v321 = vld [vmem:[%s268 + $0x1c] sm:$0xf]
        %v322 = vld [vmem:[%s268 + $0x20] sm:$0xf]
        %v323 = vld [vmem:[%s268 + $0x24] sm:$0xf]
        %v324 = vld [vmem:[%s268 + $0x28] sm:$0xf]
        %v325 = vld [vmem:[%s268 + $0x2c] sm:$0xf]
        %v326 = vld [vmem:[%s268 + $0x30] sm:$0xf]
        %v327 = vld [vmem:[%s268 + $0x34] sm:$0xf]
        %v328 = vld [vmem:[%s268 + $0x38] sm:$0xf]
        %v329 = vld [vmem:[%s268 + $0x3c] sm:$0xf]
        %v330 = vld [vmem:[%s268 + $0x40] sm:$0xf]
        %v331 = vld [vmem:[%s268 + $0x44] sm:$0xf]
        %v332 = vld [vmem:[%s268 + $0x48] sm:$0xf]
        %v333 = vld [vmem:[%s268 + $0x4c] sm:$0xf]
        %v334 = vld [vmem:[%s268 + $0x50] sm:$0xf]
        %v335 = vld [vmem:[%s268 + $0x54] sm:$0xf]
        %v336 = vld [vmem:[%s268 + $0x58] sm:$0xf]
        %v337 = vld [vmem:[%s268 + $0x5c] sm:$0xf]
        %v338 = vld [vmem:[%s268 + $0x60] sm:$0xf]
        %v339 = vld [vmem:[%s268 + $0x64] sm:$0xf]
        %v340 = vld [vmem:[%s268 + $0x68] sm:$0xf]
        %v341 = vld [vmem:[%s268 + $0x6c] sm:$0xf]
        %v342 = vld [vmem:[%s268 + $0x70] sm:$0xf]
        %v343 = vld [vmem:[%s268 + $0x74] sm:$0xf]
        %v344 = vld [vmem:[%s268 + $0x78] sm:$0xf]
        %v345 = vld [vmem:[%s268 + $0x7c] sm:$0xf]
        %v346 = vld [vmem:[#allocation5] sm:$0xf]
        %v347 = vld [vmem:[#allocation5 + $0x4] sm:$0xf]
        %v348 = vld [vmem:[#allocation5 + $0x8] sm:$0xf]
        %v349 = vld [vmem:[#allocation5 + $0xc] sm:$0xf]
        %v350 = vld [vmem:[#allocation5 + $0x10] sm:$0xf]
        %v351 = vld [vmem:[#allocation5 + $0x14] sm:$0xf]
        %v352 = vld [vmem:[#allocation5 + $0x18] sm:$0xf]
        %v353 = vld [vmem:[#allocation5 + $0x1c] sm:$0xf]
        %v354 = vld [vmem:[#allocation5 + $0x20] sm:$0xf]
        %v355 = vld [vmem:[#allocation5 + $0x24] sm:$0xf]
        %v356 = vld [vmem:[#allocation5 + $0x28] sm:$0xf]
        %v357 = vld [vmem:[#allocation5 + $0x2c] sm:$0xf]
        %v358 = vld [vmem:[#allocation5 + $0x30] sm:$0xf]
        %v359 = vld [vmem:[#allocation5 + $0x34] sm:$0xf]
        %v360 = vld [vmem:[#allocation5 + $0x38] sm:$0xf]
        %v361 = vld [vmem:[#allocation5 + $0x3c] sm:$0xf]
        %v362 = vld [vmem:[%s2] sm:$0x1]
        %v364 = vlaneseq
        %v365 = vshrl.u32 %v364, 7
        %v366 = vsub.s32 0, %v365
        %v367 = vrot.slane %v362, %v366
        %v401 = vunpack.c.l.b16 %v314
        %v402 = vunpack.c.l.b16 %v315
        %v403 = vunpack.c.l.b16 %v316
        %v404 = vunpack.c.l.b16 %v317
        %v405 = vunpack.c.l.b16 %v318
        %v406 = vunpack.c.l.b16 %v319
        %v407 = vunpack.c.l.b16 %v320
        %v408 = vunpack.c.l.b16 %v321
        %v409 = vunpack.c.l.b16 %v322
        %v410 = vunpack.c.l.b16 %v323
        %v411 = vunpack.c.l.b16 %v324
        %v412 = vunpack.c.l.b16 %v325
        %v413 = vunpack.c.l.b16 %v326
        %v414 = vunpack.c.l.b16 %v327
        %v415 = vunpack.c.l.b16 %v328
        %v416 = vunpack.c.l.b16 %v329
        %v417 = vunpack.c.l.b16 %v330
        %v418 = vunpack.c.l.b16 %v331
        %v419 = vunpack.c.l.b16 %v332
        %v420 = vunpack.c.l.b16 %v333
        %v421 = vunpack.c.l.b16 %v334
        %v422 = vunpack.c.l.b16 %v335
        %v423 = vunpack.c.l.b16 %v336
        %v424 = vunpack.c.l.b16 %v337
        %v425 = vunpack.c.l.b16 %v338
        %v426 = vunpack.c.l.b16 %v339
        %v427 = vunpack.c.l.b16 %v340
        %v428 = vunpack.c.l.b16 %v341
        %v429 = vunpack.c.l.b16 %v342
        %v430 = vunpack.c.l.b16 %v343
        %v431 = vunpack.c.l.b16 %v344
        %v432 = vunpack.c.l.b16 %v345
        %v433 = vpack.c.b16 %v402, %v401
        %v434 = vpack.c.b16 %v404, %v403
        %v435 = vpack.c.b16 %v406, %v405
        %v436 = vpack.c.b16 %v408, %v407
        %v437 = vpack.c.b16 %v410, %v409
        %v438 = vpack.c.b16 %v412, %v411
        %v439 = vpack.c.b16 %v414, %v413
        %v440 = vpack.c.b16 %v416, %v415
        %v441 = vpack.c.b16 %v418, %v417
        %v442 = vpack.c.b16 %v420, %v419
        %v443 = vpack.c.b16 %v422, %v421
        %v444 = vpack.c.b16 %v424, %v423
        %v445 = vpack.c.b16 %v426, %v425
        %v446 = vpack.c.b16 %v428, %v427
        %v447 = vpack.c.b16 %v430, %v429
        %v448 = vpack.c.b16 %v432, %v431
        %v481 = vunpack.c.l.b16 %v346
        %v482 = vunpack.c.l.b16 %v347
        %v483 = vunpack.c.l.b16 %v348
        %v484 = vunpack.c.l.b16 %v349
        %v485 = vunpack.c.l.b16 %v350
        %v486 = vunpack.c.l.b16 %v351
        %v487 = vunpack.c.l.b16 %v352
        %v488 = vunpack.c.l.b16 %v353
        %v489 = vunpack.c.l.b16 %v354
        %v490 = vunpack.c.l.b16 %v355
        %v491 = vunpack.c.l.b16 %v356
        %v492 = vunpack.c.l.b16 %v357
        %v493 = vunpack.c.l.b16 %v358
        %v494 = vunpack.c.l.b16 %v359
        %v495 = vunpack.c.l.b16 %v360
        %v496 = vunpack.c.l.b16 %v361
        %v497 = vpack.c.b16 %v482, %v481
        %v498 = vpack.c.b16 %v484, %v483
        %v499 = vpack.c.b16 %v486, %v485
        %v500 = vpack.c.b16 %v488, %v487
        %v501 = vpack.c.b16 %v490, %v489
        %v502 = vpack.c.b16 %v492, %v491
        %v503 = vpack.c.b16 %v494, %v493
        %v504 = vpack.c.b16 %v496, %v495
        %513 = vmatprep.subr.bf16.mxu0 0
        %514 = vmatpush1.bf16.msra.mxu0 %v497
        %515 = vmatprep.subr.bf16.mxu0 0
        %516 = vmatpush1.bf16.msra.mxu0 %v498
        %517 = vmatprep.subr.bf16.mxu0 0
        %518 = vmatpush1.bf16.msra.mxu0 %v499
        %519 = vmatprep.subr.bf16.mxu0 0
        %520 = vmatpush1.bf16.msra.mxu0 %v500
        %521 = vmatprep.subr.bf16.mxu0 0
        %522 = vmatpush1.bf16.msra.mxu0 %v501
        %523 = vmatprep.subr.bf16.mxu0 0
        %524 = vmatpush1.bf16.msra.mxu0 %v502
        %525 = vmatprep.subr.bf16.mxu0 0
        %526 = vmatpush1.bf16.msra.mxu0 %v503
        %527 = vmatprep.subr.bf16.mxu0 0
        %528 = vmatpush1.bf16.msra.mxu0 %v504
        %529 = vmatprep.subr.bf16.mxu0 0
        %530 = vmatpush1.bf16.msra.mxu0 0
        %531 = vmatprep.subr.bf16.mxu0 0
        %532 = vmatpush1.bf16.msra.mxu0 0
        %533 = vmatprep.subr.bf16.mxu0 0
        %534 = vmatpush1.bf16.msra.mxu0 0
        %535 = vmatprep.subr.bf16.mxu0 0
        %536 = vmatpush1.bf16.msra.mxu0 0
        %537 = vmatprep.subr.bf16.mxu0 0
        %538 = vmatpush1.bf16.msra.mxu0 0
        %539 = vmatprep.subr.bf16.mxu0 0
        %540 = vmatpush1.bf16.msra.mxu0 0
        %541 = vmatprep.subr.bf16.mxu0 0
        %542 = vmatpush1.bf16.msra.mxu0 0
        %543 = vmatprep.subr.bf16.mxu0 0
        %544 = vmatpush1.bf16.msra.mxu0 0
        %545 = vmatprep.mubr.bf16.mxu0 0
        %546 = vmatmul.mubr.bf16.gmra.mrb[0].mxu0 %v433
        %v547 = vpop.f32.mrb[0].mxu0
        %v548 = vadd.f32 %v367, %v547
        %v549 = vpop.f32.mrb[0].mxu0
        %v550 = vpop.f32.mrb[0].mxu0
        %v551 = vadd.f32 %v367, %v550
        %v552 = vpop.f32.mrb[0].mxu0
        %553 = vmatprep.mubr.bf16.mxu0 0
        %554 = vmatmul.mubr.bf16.gmra.mrb[0].mxu0 %v434
        %v555 = vpop.f32.mrb[0].mxu0
        %v556 = vadd.f32 %v367, %v555
        %v557 = vpop.f32.mrb[0].mxu0
        %v558 = vpop.f32.mrb[0].mxu0
        %v559 = vadd.f32 %v367, %v558
        %v560 = vpop.f32.mrb[0].mxu0
        %561 = vmatprep.mubr.bf16.mxu0 0
        %562 = vmatmul.mubr.bf16.gmra.mrb[0].mxu0 %v435
        %v563 = vpop.f32.mrb[0].mxu0
        %v564 = vadd.f32 %v367, %v563
        %v565 = vpop.f32.mrb[0].mxu0
        %v566 = vpop.f32.mrb[0].mxu0
        %v567 = vadd.f32 %v367, %v566
        %v568 = vpop.f32.mrb[0].mxu0
        %569 = vmatprep.mubr.bf16.mxu0 0
        %570 = vmatmul.mubr.bf16.gmra.mrb[0].mxu0 %v436
        %v571 = vpop.f32.mrb[0].mxu0
        %v572 = vadd.f32 %v367, %v571
        %v573 = vpop.f32.mrb[0].mxu0
        %v574 = vpop.f32.mrb[0].mxu0
        %v575 = vadd.f32 %v367, %v574
        %v576 = vpop.f32.mrb[0].mxu0
        %577 = vmatprep.mubr.bf16.mxu0 0
        %578 = vmatmul.mubr.bf16.gmra.mrb[0].mxu0 %v437
        %v579 = vpop.f32.mrb[0].mxu0
        %v580 = vadd.f32 %v367, %v579
        %v581 = vpop.f32.mrb[0].mxu0
        %v582 = vpop.f32.mrb[0].mxu0
        %v583 = vadd.f32 %v367, %v582
        %v584 = vpop.f32.mrb[0].mxu0
        %585 = vmatprep.mubr.bf16.mxu0 0
        %586 = vmatmul.mubr.bf16.gmra.mrb[0].mxu0 %v438
        %v587 = vpop.f32.mrb[0].mxu0
        %v588 = vadd.f32 %v367, %v587
        %v589 = vpop.f32.mrb[0].mxu0
        %v590 = vpop.f32.mrb[0].mxu0
        %v591 = vadd.f32 %v367, %v590
        %v592 = vpop.f32.mrb[0].mxu0
        %593 = vmatprep.mubr.bf16.mxu0 0
        %594 = vmatmul.mubr.bf16.gmra.mrb[0].mxu0 %v439
        %v595 = vpop.f32.mrb[0].mxu0
        %v596 = vadd.f32 %v367, %v595
        %v597 = vpop.f32.mrb[0].mxu0
        %v598 = vpop.f32.mrb[0].mxu0
        %v599 = vadd.f32 %v367, %v598
        %v600 = vpop.f32.mrb[0].mxu0
        %601 = vmatprep.mubr.bf16.mxu0 0
        %602 = vmatmul.mubr.bf16.gmra.mrb[0].mxu0 %v440
        %v603 = vpop.f32.mrb[0].mxu0
        %v604 = vadd.f32 %v367, %v603
        %v605 = vpop.f32.mrb[0].mxu0
        %v606 = vpop.f32.mrb[0].mxu0
        %v607 = vadd.f32 %v367, %v606
        %v608 = vpop.f32.mrb[0].mxu0
        %609 = vmatprep.mubr.bf16.mxu0 0
        %610 = vmatmul.mubr.bf16.gmra.mrb[0].mxu0 %v441
        %v611 = vpop.f32.mrb[0].mxu0
        %v612 = vadd.f32 %v367, %v611
        %v613 = vpop.f32.mrb[0].mxu0
        %v614 = vpop.f32.mrb[0].mxu0
        %v615 = vadd.f32 %v367, %v614
        %v616 = vpop.f32.mrb[0].mxu0
        %617 = vmatprep.mubr.bf16.mxu0 0
        %618 = vmatmul.mubr.bf16.gmra.mrb[0].mxu0 %v442
        %v619 = vpop.f32.mrb[0].mxu0
        %v620 = vadd.f32 %v367, %v619
        %v621 = vpop.f32.mrb[0].mxu0
        %v622 = vpop.f32.mrb[0].mxu0
        %v623 = vadd.f32 %v367, %v622
        %v624 = vpop.f32.mrb[0].mxu0
        %625 = vmatprep.mubr.bf16.mxu0 0
        %626 = vmatmul.mubr.bf16.gmra.mrb[0].mxu0 %v443
        %v627 = vpop.f32.mrb[0].mxu0
        %v628 = vadd.f32 %v367, %v627
        %v629 = vpop.f32.mrb[0].mxu0
        %v630 = vpop.f32.mrb[0].mxu0
        %v631 = vadd.f32 %v367, %v630
        %v632 = vpop.f32.mrb[0].mxu0
        %633 = vmatprep.mubr.bf16.mxu0 0
        %634 = vmatmul.mubr.bf16.gmra.mrb[0].mxu0 %v444
        %v635 = vpop.f32.mrb[0].mxu0
        %v636 = vadd.f32 %v367, %v635
        %v637 = vpop.f32.mrb[0].mxu0
        %v638 = vpop.f32.mrb[0].mxu0
        %v639 = vadd.f32 %v367, %v638
        %v640 = vpop.f32.mrb[0].mxu0
        %641 = vmatprep.mubr.bf16.mxu0 0
        %642 = vmatmul.mubr.bf16.gmra.mrb[0].mxu0 %v445
        %v643 = vpop.f32.mrb[0].mxu0
        %v644 = vadd.f32 %v367, %v643
        %v645 = vpop.f32.mrb[0].mxu0
        %v646 = vpop.f32.mrb[0].mxu0
        %v647 = vadd.f32 %v367, %v646
        %v648 = vpop.f32.mrb[0].mxu0
        %649 = vmatprep.mubr.bf16.mxu0 0
        %650 = vmatmul.mubr.bf16.gmra.mrb[0].mxu0 %v446
        %v651 = vpop.f32.mrb[0].mxu0
        %v652 = vadd.f32 %v367, %v651
        %v653 = vpop.f32.mrb[0].mxu0
        %v654 = vpop.f32.mrb[0].mxu0
        %v655 = vadd.f32 %v367, %v654
        %v656 = vpop.f32.mrb[0].mxu0
        %657 = vmatprep.mubr.bf16.mxu0 0
        %658 = vmatmul.mubr.bf16.gmra.mrb[0].mxu0 %v447
        %v659 = vpop.f32.mrb[0].mxu0
        %v660 = vadd.f32 %v367, %v659
        %v661 = vpop.f32.mrb[0].mxu0
        %v662 = vpop.f32.mrb[0].mxu0
        %v663 = vadd.f32 %v367, %v662
        %v664 = vpop.f32.mrb[0].mxu0
        %665 = vmatprep.mubr.bf16.mxu0 0
        %666 = vmatmul.mubr.bf16.gmra.mrb[0].mxu0 %v448
        %v667 = vpop.f32.mrb[0].mxu0
        %v668 = vadd.f32 %v367, %v667
        %v669 = vpop.f32.mrb[0].mxu0
        %v670 = vpop.f32.mrb[0].mxu0
        %v671 = vadd.f32 %v367, %v670
        %v672 = vpop.f32.mrb[0].mxu0
        %673 = vdwg.mxu0
        %v674 = vmax.f32 %v548, 0.0
        %v675 = vmax.f32 %v551, 0.0
        %v676 = vmax.f32 %v556, 0.0
        %v677 = vmax.f32 %v559, 0.0
        %v678 = vmax.f32 %v564, 0.0
        %v679 = vmax.f32 %v567, 0.0
        %v680 = vmax.f32 %v572, 0.0
        %v681 = vmax.f32 %v575, 0.0
        %v682 = vmax.f32 %v580, 0.0
        %v683 = vmax.f32 %v583, 0.0
        %v684 = vmax.f32 %v588, 0.0
        %v685 = vmax.f32 %v591, 0.0
        %v686 = vmax.f32 %v596, 0.0
        %v687 = vmax.f32 %v599, 0.0
        %v688 = vmax.f32 %v604, 0.0
        %v689 = vmax.f32 %v607, 0.0
        %v690 = vmax.f32 %v612, 0.0
        %v691 = vmax.f32 %v615, 0.0
        %v692 = vmax.f32 %v620, 0.0
        %v693 = vmax.f32 %v623, 0.0
        %v694 = vmax.f32 %v628, 0.0
        %v695 = vmax.f32 %v631, 0.0
        %v696 = vmax.f32 %v636, 0.0
        %v697 = vmax.f32 %v639, 0.0
        %v698 = vmax.f32 %v644, 0.0
        %v699 = vmax.f32 %v647, 0.0
        %v700 = vmax.f32 %v652, 0.0
        %v701 = vmax.f32 %v655, 0.0
        %v702 = vmax.f32 %v660, 0.0
        %v703 = vmax.f32 %v663, 0.0
        %v704 = vmax.f32 %v668, 0.0
        %v705 = vmax.f32 %v671, 0.0
        %v706 = vpack.c.bf16 %v675, %v674
        %v707 = vpack.c.bf16 %v677, %v676
        %v708 = vpack.c.bf16 %v679, %v678
        %v709 = vpack.c.bf16 %v681, %v680
        %v710 = vpack.c.bf16 %v683, %v682
        %v711 = vpack.c.bf16 %v685, %v684
        %v712 = vpack.c.bf16 %v687, %v686
        %v713 = vpack.c.bf16 %v689, %v688
        %v714 = vpack.c.bf16 %v691, %v690
        %v715 = vpack.c.bf16 %v693, %v692
        %v716 = vpack.c.bf16 %v695, %v694
        %v717 = vpack.c.bf16 %v697, %v696
        %v718 = vpack.c.bf16 %v699, %v698
        %v719 = vpack.c.bf16 %v701, %v700
        %v720 = vpack.c.bf16 %v703, %v702
        %v721 = vpack.c.bf16 %v705, %v704
        %v722 = vld [vmem:[#allocation7] sm:$0xff]
        %v723 = vld [vmem:[#allocation7 + $0x8] sm:$0xff]
        %v724 = vld [vmem:[#allocation7 + $0x10] sm:$0xff]
        %v725 = vld [vmem:[#allocation7 + $0x18] sm:$0xff]
        %v726 = vld [vmem:[#allocation7 + $0x20] sm:$0xff]
        %v727 = vld [vmem:[#allocation7 + $0x28] sm:$0xff]
        %v728 = vld [vmem:[#allocation7 + $0x30] sm:$0xff]
        %v729 = vld [vmem:[#allocation7 + $0x38] sm:$0xff]
        %v730 = vld [vmem:[#allocation7 + $0x40] sm:$0xff]
        %v731 = vld [vmem:[#allocation7 + $0x48] sm:$0xff]
        %v732 = vld [vmem:[#allocation7 + $0x50] sm:$0xff]
        %v733 = vld [vmem:[#allocation7 + $0x58] sm:$0xff]
        %v734 = vld [vmem:[#allocation7 + $0x60] sm:$0xff]
        %v735 = vld [vmem:[#allocation7 + $0x68] sm:$0xff]
        %v736 = vld [vmem:[#allocation7 + $0x70] sm:$0xff]
        %v737 = vld [vmem:[#allocation7 + $0x78] sm:$0xff]
        %v738 = vld [vmem:[%s4] sm:$0x3]
        %v740 = vlaneseq
        %v741 = vshrl.u32 %v740, 7
        %v742 = vsub.s32 0, %v741
        %v743 = vrot.slane %v738, %v742
        %v744 = vlaneseq
        %v745 = vshrl.u32 %v744, 7
        %v746 = vsub.s32 1, %v745
        %v747 = vrot.slane %v738, %v746
        %v766 = vunpack.c.l.b16 %v722
        %v767 = vunpack.c.h.b16 %v722
        %v768 = vunpack.c.l.b16 %v723
        %v769 = vunpack.c.h.b16 %v723
        %v770 = vunpack.c.l.b16 %v724
        %v771 = vunpack.c.h.b16 %v724
        %v772 = vunpack.c.l.b16 %v725
        %v773 = vunpack.c.h.b16 %v725
        %v774 = vunpack.c.l.b16 %v726
        %v775 = vunpack.c.h.b16 %v726
        %v776 = vunpack.c.l.b16 %v727
        %v777 = vunpack.c.h.b16 %v727
        %v778 = vunpack.c.l.b16 %v728
        %v779 = vunpack.c.h.b16 %v728
        %v780 = vunpack.c.l.b16 %v729
        %v781 = vunpack.c.h.b16 %v729
        %v782 = vunpack.c.l.b16 %v730
        %v783 = vunpack.c.h.b16 %v730
        %v784 = vunpack.c.l.b16 %v731
        %v785 = vunpack.c.h.b16 %v731
        %v786 = vunpack.c.l.b16 %v732
        %v787 = vunpack.c.h.b16 %v732
        %v788 = vunpack.c.l.b16 %v733
        %v789 = vunpack.c.h.b16 %v733
        %v790 = vunpack.c.l.b16 %v734
        %v791 = vunpack.c.h.b16 %v734
        %v792 = vunpack.c.l.b16 %v735
        %v793 = vunpack.c.h.b16 %v735
        %v794 = vunpack.c.l.b16 %v736
        %v795 = vunpack.c.h.b16 %v736
        %v796 = vunpack.c.l.b16 %v737
        %v797 = vunpack.c.h.b16 %v737
        %v798 = vpack.c.b16 %v768, %v766
        %v799 = vpack.c.b16 %v769, %v767
        %v800 = vpack.c.b16 %v772, %v770
        %v801 = vpack.c.b16 %v773, %v771
        %v802 = vpack.c.b16 %v776, %v774
        %v803 = vpack.c.b16 %v777, %v775
        %v804 = vpack.c.b16 %v780, %v778
        %v805 = vpack.c.b16 %v781, %v779
        %v806 = vpack.c.b16 %v784, %v782
        %v807 = vpack.c.b16 %v785, %v783
        %v808 = vpack.c.b16 %v788, %v786
        %v809 = vpack.c.b16 %v789, %v787
        %v810 = vpack.c.b16 %v792, %v790
        %v811 = vpack.c.b16 %v793, %v791
        %v812 = vpack.c.b16 %v796, %v794
        %v813 = vpack.c.b16 %v797, %v795
        %830 = vmatprep.subr.bf16.mxu0 %v799
        %831 = vmatpush1.bf16.msra.mxu0 %v798
        %832 = vmatprep.subr.bf16.mxu0 %v801
        %833 = vmatpush1.bf16.msra.mxu0 %v800
        %834 = vmatprep.subr.bf16.mxu0 %v803
        %835 = vmatpush1.bf16.msra.mxu0 %v802
        %836 = vmatprep.subr.bf16.mxu0 %v805
        %837 = vmatpush1.bf16.msra.mxu0 %v804
        %838 = vmatprep.subr.bf16.mxu0 %v807
        %839 = vmatpush1.bf16.msra.mxu0 %v806
        %840 = vmatprep.subr.bf16.mxu0 %v809
        %841 = vmatpush1.bf16.msra.mxu0 %v808
        %842 = vmatprep.subr.bf16.mxu0 %v811
        %843 = vmatpush1.bf16.msra.mxu0 %v810
        %844 = vmatprep.subr.bf16.mxu0 %v813
        %845 = vmatpush1.bf16.msra.mxu0 %v812
        %846 = vmatprep.subr.bf16.mxu0 0
        %847 = vmatpush1.bf16.msra.mxu0 0
        %848 = vmatprep.subr.bf16.mxu0 0
        %849 = vmatpush1.bf16.msra.mxu0 0
        %850 = vmatprep.subr.bf16.mxu0 0
        %851 = vmatpush1.bf16.msra.mxu0 0
        %852 = vmatprep.subr.bf16.mxu0 0
        %853 = vmatpush1.bf16.msra.mxu0 0
        %854 = vmatprep.subr.bf16.mxu0 0
        %855 = vmatpush1.bf16.msra.mxu0 0
        %856 = vmatprep.subr.bf16.mxu0 0
        %857 = vmatpush1.bf16.msra.mxu0 0
        %858 = vmatprep.subr.bf16.mxu0 0
        %859 = vmatpush1.bf16.msra.mxu0 0
        %860 = vmatprep.subr.bf16.mxu0 0
        %861 = vmatpush1.bf16.msra.mxu0 0
        %862 = vmatprep.mubr.bf16.mxu0 0
        %863 = vmatmul.mubr.bf16.gmra.mrb[0].mxu0 %v706
        %v864 = vpop.f32.mrb[0].mxu0
        %v865 = vadd.f32 %v743, %v864
        %v866 = vpop.f32.mrb[0].mxu0
        %v867 = vadd.f32 %v747, %v866
        %v868 = vpop.f32.mrb[0].mxu0
        %v869 = vadd.f32 %v743, %v868
        %v870 = vpop.f32.mrb[0].mxu0
        %v871 = vadd.f32 %v747, %v870
        %872 = vmatprep.mubr.bf16.mxu0 0
        %873 = vmatmul.mubr.bf16.gmra.mrb[0].mxu0 %v707
        %v874 = vpop.f32.mrb[0].mxu0
        %v875 = vadd.f32 %v743, %v874
        %v876 = vpop.f32.mrb[0].mxu0
        %v877 = vadd.f32 %v747, %v876
        %v878 = vpop.f32.mrb[0].mxu0
        %v879 = vadd.f32 %v743, %v878
        %v880 = vpop.f32.mrb[0].mxu0
        %v881 = vadd.f32 %v747, %v880
        %882 = vmatprep.mubr.bf16.mxu0 0
        %883 = vmatmul.mubr.bf16.gmra.mrb[0].mxu0 %v708
        %v884 = vpop.f32.mrb[0].mxu0
        %v885 = vadd.f32 %v743, %v884
        %v886 = vpop.f32.mrb[0].mxu0
        %v887 = vadd.f32 %v747, %v886
        %v888 = vpop.f32.mrb[0].mxu0
        %v889 = vadd.f32 %v743, %v888
        %v890 = vpop.f32.mrb[0].mxu0
        %v891 = vadd.f32 %v747, %v890
        %892 = vmatprep.mubr.bf16.mxu0 0
        %893 = vmatmul.mubr.bf16.gmra.mrb[0].mxu0 %v709
        %v894 = vpop.f32.mrb[0].mxu0
        %v895 = vadd.f32 %v743, %v894
        %v896 = vpop.f32.mrb[0].mxu0
        %v897 = vadd.f32 %v747, %v896
        %v898 = vpop.f32.mrb[0].mxu0
        %v899 = vadd.f32 %v743, %v898
        %v900 = vpop.f32.mrb[0].mxu0
        %v901 = vadd.f32 %v747, %v900
        %902 = vmatprep.mubr.bf16.mxu0 0
        %903 = vmatmul.mubr.bf16.gmra.mrb[0].mxu0 %v710
        %v904 = vpop.f32.mrb[0].mxu0
        %v905 = vadd.f32 %v743, %v904
        %v906 = vpop.f32.mrb[0].mxu0
        %v907 = vadd.f32 %v747, %v906
        %v908 = vpop.f32.mrb[0].mxu0
        %v909 = vadd.f32 %v743, %v908
        %v910 = vpop.f32.mrb[0].mxu0
        %v911 = vadd.f32 %v747, %v910
        %912 = vmatprep.mubr.bf16.mxu0 0
        %913 = vmatmul.mubr.bf16.gmra.mrb[0].mxu0 %v711
        %v914 = vpop.f32.mrb[0].mxu0
        %v915 = vadd.f32 %v743, %v914
        %v916 = vpop.f32.mrb[0].mxu0
        %v917 = vadd.f32 %v747, %v916
        %v918 = vpop.f32.mrb[0].mxu0
        %v919 = vadd.f32 %v743, %v918
        %v920 = vpop.f32.mrb[0].mxu0
        %v921 = vadd.f32 %v747, %v920
        %922 = vmatprep.mubr.bf16.mxu0 0
        %923 = vmatmul.mubr.bf16.gmra.mrb[0].mxu0 %v712
        %v924 = vpop.f32.mrb[0].mxu0
        %v925 = vadd.f32 %v743, %v924
        %v926 = vpop.f32.mrb[0].mxu0
        %v927 = vadd.f32 %v747, %v926
        %v928 = vpop.f32.mrb[0].mxu0
        %v929 = vadd.f32 %v743, %v928
        %v930 = vpop.f32.mrb[0].mxu0
        %v931 = vadd.f32 %v747, %v930
        %932 = vmatprep.mubr.bf16.mxu0 0
        %933 = vmatmul.mubr.bf16.gmra.mrb[0].mxu0 %v713
        %v934 = vpop.f32.mrb[0].mxu0
        %v935 = vadd.f32 %v743, %v934
        %v936 = vpop.f32.mrb[0].mxu0
        %v937 = vadd.f32 %v747, %v936
        %v938 = vpop.f32.mrb[0].mxu0
        %v939 = vadd.f32 %v743, %v938
        %v940 = vpop.f32.mrb[0].mxu0
        %v941 = vadd.f32 %v747, %v940
        %942 = vmatprep.mubr.bf16.mxu0 0
        %943 = vmatmul.mubr.bf16.gmra.mrb[0].mxu0 %v714
        %v944 = vpop.f32.mrb[0].mxu0
        %v945 = vadd.f32 %v743, %v944
        %v946 = vpop.f32.mrb[0].mxu0
        %v947 = vadd.f32 %v747, %v946
        %v948 = vpop.f32.mrb[0].mxu0
        %v949 = vadd.f32 %v743, %v948
        %v950 = vpop.f32.mrb[0].mxu0
        %v951 = vadd.f32 %v747, %v950
        %952 = vmatprep.mubr.bf16.mxu0 0
        %953 = vmatmul.mubr.bf16.gmra.mrb[0].mxu0 %v715
        %v954 = vpop.f32.mrb[0].mxu0
        %v955 = vadd.f32 %v743, %v954
        %v956 = vpop.f32.mrb[0].mxu0
        %v957 = vadd.f32 %v747, %v956
        %v958 = vpop.f32.mrb[0].mxu0
        %v959 = vadd.f32 %v743, %v958
        %v960 = vpop.f32.mrb[0].mxu0
        %v961 = vadd.f32 %v747, %v960
        %962 = vmatprep.mubr.bf16.mxu0 0
        %963 = vmatmul.mubr.bf16.gmra.mrb[0].mxu0 %v716
        %v964 = vpop.f32.mrb[0].mxu0
        %v965 = vadd.f32 %v743, %v964
        %v966 = vpop.f32.mrb[0].mxu0
        %v967 = vadd.f32 %v747, %v966
        %v968 = vpop.f32.mrb[0].mxu0
        %v969 = vadd.f32 %v743, %v968
        %v970 = vpop.f32.mrb[0].mxu0
        %v971 = vadd.f32 %v747, %v970
        %972 = vmatprep.mubr.bf16.mxu0 0
        %973 = vmatmul.mubr.bf16.gmra.mrb[0].mxu0 %v717
        %v974 = vpop.f32.mrb[0].mxu0
        %v975 = vadd.f32 %v743, %v974
        %v976 = vpop.f32.mrb[0].mxu0
        %v977 = vadd.f32 %v747, %v976
        %v978 = vpop.f32.mrb[0].mxu0
        %v979 = vadd.f32 %v743, %v978
        %v980 = vpop.f32.mrb[0].mxu0
        %v981 = vadd.f32 %v747, %v980
        %982 = vmatprep.mubr.bf16.mxu0 0
        %983 = vmatmul.mubr.bf16.gmra.mrb[0].mxu0 %v718
        %v984 = vpop.f32.mrb[0].mxu0
        %v985 = vadd.f32 %v743, %v984
        %v986 = vpop.f32.mrb[0].mxu0
        %v987 = vadd.f32 %v747, %v986
        %v988 = vpop.f32.mrb[0].mxu0
        %v989 = vadd.f32 %v743, %v988
        %v990 = vpop.f32.mrb[0].mxu0
        %v991 = vadd.f32 %v747, %v990
        %992 = vmatprep.mubr.bf16.mxu0 0
        %993 = vmatmul.mubr.bf16.gmra.mrb[0].mxu0 %v719
        %v994 = vpop.f32.mrb[0].mxu0
        %v995 = vadd.f32 %v743, %v994
        %v996 = vpop.f32.mrb[0].mxu0
        %v997 = vadd.f32 %v747, %v996
        %v998 = vpop.f32.mrb[0].mxu0
        %v999 = vadd.f32 %v743, %v998
        %v1000 = vpop.f32.mrb[0].mxu0
        %v1001 = vadd.f32 %v747, %v1000
        %1002 = vmatprep.mubr.bf16.mxu0 0
        %1003 = vmatmul.mubr.bf16.gmra.mrb[0].mxu0 %v720
        %v1004 = vpop.f32.mrb[0].mxu0
        %v1005 = vadd.f32 %v743, %v1004
        %v1006 = vpop.f32.mrb[0].mxu0
        %v1007 = vadd.f32 %v747, %v1006
        %v1008 = vpop.f32.mrb[0].mxu0
        %v1009 = vadd.f32 %v743, %v1008
        %v1010 = vpop.f32.mrb[0].mxu0
        %v1011 = vadd.f32 %v747, %v1010
        %1012 = vmatprep.mubr.bf16.mxu0 0
        %1013 = vmatmul.mubr.bf16.gmra.mrb[0].mxu0 %v721
        %v1014 = vpop.f32.mrb[0].mxu0
        %v1015 = vadd.f32 %v743, %v1014
        %v1016 = vpop.f32.mrb[0].mxu0
        %v1017 = vadd.f32 %v747, %v1016
        %v1018 = vpop.f32.mrb[0].mxu0
        %v1019 = vadd.f32 %v743, %v1018
        %v1020 = vpop.f32.mrb[0].mxu0
        %v1021 = vadd.f32 %v747, %v1020
        %1022 = vdwg.mxu0
        %1023 = vst [vmem:[%s302] sm:$0xff] %v865
        %1024 = vst [vmem:[%s302 + $0x8] sm:$0xff] %v869
        %1025 = vst [vmem:[%s302 + $0x10] sm:$0xff] %v875
        %1026 = vst [vmem:[%s302 + $0x18] sm:$0xff] %v879
        %1027 = vst [vmem:[%s302 + $0x20] sm:$0xff] %v885
        %1028 = vst [vmem:[%s302 + $0x28] sm:$0xff] %v889
        %1029 = vst [vmem:[%s302 + $0x30] sm:$0xff] %v895
        %1030 = vst [vmem:[%s302 + $0x38] sm:$0xff] %v899
        %1031 = vst [vmem:[%s302 + $0x40] sm:$0xff] %v905
        %1032 = vst [vmem:[%s302 + $0x48] sm:$0xff] %v909
        %1033 = vst [vmem:[%s302 + $0x50] sm:$0xff] %v915
        %1034 = vst [vmem:[%s302 + $0x58] sm:$0xff] %v919
        %1035 = vst [vmem:[%s302 + $0x60] sm:$0xff] %v925
        %1036 = vst [vmem:[%s302 + $0x68] sm:$0xff] %v929
        %1037 = vst [vmem:[%s302 + $0x70] sm:$0xff] %v935
        %1038 = vst [vmem:[%s302 + $0x78] sm:$0xff] %v939
        %1039 = vst [vmem:[%s302 + $0x80] sm:$0xff] %v945
        %1040 = vst [vmem:[%s302 + $0x88] sm:$0xff] %v949
        %1041 = vst [vmem:[%s302 + $0x90] sm:$0xff] %v955
        %1042 = vst [vmem:[%s302 + $0x98] sm:$0xff] %v959
        %1043 = vst [vmem:[%s302 + $0xa0] sm:$0xff] %v965
        %1044 = vst [vmem:[%s302 + $0xa8] sm:$0xff] %v969
        %1045 = vst [vmem:[%s302 + $0xb0] sm:$0xff] %v975
        %1046 = vst [vmem:[%s302 + $0xb8] sm:$0xff] %v979
        %1047 = vst [vmem:[%s302 + $0xc0] sm:$0xff] %v985
        %1048 = vst [vmem:[%s302 + $0xc8] sm:$0xff] %v989
        %1049 = vst [vmem:[%s302 + $0xd0] sm:$0xff] %v995
        %1050 = vst [vmem:[%s302 + $0xd8] sm:$0xff] %v999
        %1051 = vst [vmem:[%s302 + $0xe0] sm:$0xff] %v1005
        %1052 = vst [vmem:[%s302 + $0xe8] sm:$0xff] %v1009
        %1053 = vst [vmem:[%s302 + $0xf0] sm:$0xff] %v1015
        %1054 = vst [vmem:[%s302 + $0xf8] sm:$0xff] %v1019
        %1055 = vst [vmem:[%s309] sm:$0xff] %v867
        %1056 = vst [vmem:[%s309 + $0x8] sm:$0xff] %v871
        %1057 = vst [vmem:[%s309 + $0x10] sm:$0xff] %v877
        %1058 = vst [vmem:[%s309 + $0x18] sm:$0xff] %v881
        %1059 = vst [vmem:[%s309 + $0x20] sm:$0xff] %v887
        %1060 = vst [vmem:[%s309 + $0x28] sm:$0xff] %v891
        %1061 = vst [vmem:[%s309 + $0x30] sm:$0xff] %v897
        %1062 = vst [vmem:[%s309 + $0x38] sm:$0xff] %v901
        %1063 = vst [vmem:[%s309 + $0x40] sm:$0xff] %v907
        %1064 = vst [vmem:[%s309 + $0x48] sm:$0xff] %v911
        %1065 = vst [vmem:[%s309 + $0x50] sm:$0xff] %v917
        %1066 = vst [vmem:[%s309 + $0x58] sm:$0xff] %v921
        %1067 = vst [vmem:[%s309 + $0x60] sm:$0xff] %v927
        %1068 = vst [vmem:[%s309 + $0x68] sm:$0xff] %v931
        %1069 = vst [vmem:[%s309 + $0x70] sm:$0xff] %v937
        %1070 = vst [vmem:[%s309 + $0x78] sm:$0xff] %v941
        %1071 = vst [vmem:[%s309 + $0x80] sm:$0xff] %v947
        %1072 = vst [vmem:[%s309 + $0x88] sm:$0xff] %v951
        %1073 = vst [vmem:[%s309 + $0x90] sm:$0xff] %v957
        %1074 = vst [vmem:[%s309 + $0x98] sm:$0xff] %v961
        %1075 = vst [vmem:[%s309 + $0xa0] sm:$0xff] %v967
        %1076 = vst [vmem:[%s309 + $0xa8] sm:$0xff] %v971
        %1077 = vst [vmem:[%s309 + $0xb0] sm:$0xff] %v977
        %1078 = vst [vmem:[%s309 + $0xb8] sm:$0xff] %v981
        %1079 = vst [vmem:[%s309 + $0xc0] sm:$0xff] %v987
        %1080 = vst [vmem:[%s309 + $0xc8] sm:$0xff] %v991
        %1081 = vst [vmem:[%s309 + $0xd0] sm:$0xff] %v997
        %1082 = vst [vmem:[%s309 + $0xd8] sm:$0xff] %v1001
        %1083 = vst [vmem:[%s309 + $0xe0] sm:$0xff] %v1007
        %1084 = vst [vmem:[%s309 + $0xe8] sm:$0xff] %v1011
        %1085 = vst [vmem:[%s309 + $0xf0] sm:$0xff] %v1017
        %1086 = vst [vmem:[%s309 + $0xf8] sm:$0xff] %v1021
        %s1087 = sand.u32 %s146, 1
        %s1088 = scalar_lea.sflag [#allocation4], %s1087
        %s1089 = sand.u32 %s146, 1
        %s1090 = smul.addr %s1089, 256
        %s1091 = scalar_lea.vmem [#allocation8], %s1090
        %s1092 = sand.u32 %s172, 1
        %s1093 = scalar_lea.sflag [#allocation10], %s1092
        %s1094 = sand.u32 %s172, 1
        %s1095 = smul.addr %s1094, 256
        %s1096 = scalar_lea.vmem [#allocation9], %s1095
        // Predicated region
        $region53: #{tpu_custom_call.1} parent=39 // pred_check
          %p1097 = pneg %p156
        $region54: #{tpu_custom_call.1} parent=39 // pred_check_branch
          %1099 = sbr.rel (%p1097) target = $region56
        $region55: #{tpu_custom_call.1} parent=39 // pred_region
          %s1100 = smul.u32 32, %s28
          %s1102 = ssub.s32 4096, 4096
          %1103 = vsyncadd %s1088, %s1102
          %s1104 = smul.addr %s1100, 128
          %s1105 = scalar_lea.hbm %s5, %s1104
          %s1106 = sshll.u32 %s1091, 4
          %s1107 = int_to_ptr.vmem [resolvable:$true] %s1106
          %1112 = dma.vmem_to_hbm [thread:$0]  %s1107, 4096, %s1105, %s1088, 128, 128, 8
        $region56: #{tpu_custom_call.1} parent=39 // pred_fallthru
          _
        // Predicated region
        $region57: #{tpu_custom_call.1} parent=39 // pred_check
          %p1113 = pneg %p182
        $region58: #{tpu_custom_call.1} parent=39 // pred_check_branch
          %1115 = sbr.rel (%p1113) target = $region60
        $region59: #{tpu_custom_call.1} parent=39 // pred_region
          %s1116 = smul.u32 32, %s28
          %s1118 = ssub.s32 4096, 4096
          %1119 = vsyncadd %s1093, %s1118
          %s1120 = smul.addr %s1116, 128
          %s1121 = scalar_lea.hbm %s6, %s1120
          %s1122 = sshll.u32 %s1096, 4
          %s1123 = int_to_ptr.vmem [resolvable:$true] %s1122
          %1128 = dma.vmem_to_hbm [thread:$0]  %s1123, 4096, %s1121, %s1093, 128, 128, 8
        $region60: #{tpu_custom_call.1} parent=39 // pred_fallthru
          _
      $region40: #{tpu_custom_call.1} parent=5 // pred_fallthru
        _
      %p1129 = scmp.le.s32.totalorder 2, %s23
      // Predicated region
      $region61: #{tpu_custom_call.1} parent=5 // pred_check
        %p1130 = pneg %p1129
      $region62: #{tpu_custom_call.1} parent=5 // pred_check_branch
        %1132 = sbr.rel (%p1130) target = $region64
      $region63: #{tpu_custom_call.1} parent=5 // pred_region
        %s1133 = ssub.s32 %s23, 2
        // Predicated region
        $region65: #{tpu_custom_call.1} parent=63 // pred_check
          %p1134 = pneg %p162
        $region66: #{tpu_custom_call.1} parent=63 // pred_check_branch
          %1136 = sbr.rel (%p1134) target = $region68
        $region67: #{tpu_custom_call.1} parent=63 // pred_region
          %s1137 = sand.u32 %s147, 1
          %s1138 = scalar_lea.sflag [#allocation4], %s1137
          %s1139 = sand.u32 %s147, 1
          %s1140 = smul.addr %s1139, 256
          %s1141 = scalar_lea.vmem [#allocation8], %s1140
          %1142 = dma.done %s1138, 4096
        $region68: #{tpu_custom_call.1} parent=63 // pred_fallthru
          _
        // Predicated region
        $region69: #{tpu_custom_call.1} parent=63 // pred_check
          %p1143 = pneg %p188
        $region70: #{tpu_custom_call.1} parent=63 // pred_check_branch
          %1145 = sbr.rel (%p1143) target = $region72
        $region71: #{tpu_custom_call.1} parent=63 // pred_region
          %s1146 = sand.u32 %s173, 1
          %s1147 = scalar_lea.sflag [#allocation10], %s1146
          %s1148 = sand.u32 %s173, 1
          %s1149 = smul.addr %s1148, 256
          %s1150 = scalar_lea.vmem [#allocation9], %s1149
          %1151 = dma.done %s1147, 4096
        $region72: #{tpu_custom_call.1} parent=63 // pred_fallthru
          _
      $region64: #{tpu_custom_call.1} parent=5 // pred_fallthru
        _
    $region6: #{tpu_custom_call.1} parent=1 // loop_footer
      %s27 = sadd.s32 1, %s23
    $region7: #{tpu_custom_call.1} parent=1 // loop_footer_branch
      %22 = sbr.rel target = $region3
    $region8: #{tpu_custom_call.1} parent=1 // loop_exit
      _
    %1152 = vsyncpa [#allocation3], 1
    %s1153 = scalar_lea.sflag [#allocation3], 1
    %1154 = vsyncpa %s1153, 1
    %1155 = vsyncpa [#allocation6], 1
    %1156 = vsyncpa [#allocation4], 1
    %s1157 = scalar_lea.sflag [#allocation4], 1
    %1158 = vsyncpa %s1157, 1
    %1159 = vsyncpa [#allocation10], 1
    %s1160 = scalar_lea.sflag [#allocation10], 1
    %1161 = vsyncpa %s1160, 1

</llo_original>
